<compile_context>
chip_gen: v7x
topology: tpu7x:2x2x1
jax: 0.10.0
libtpu: 0.0.40
codegen_flags: <defaults>
</compile_context>

<pallas_src>
import math

import jax
import jax.numpy as jnp
from jax.experimental import pallas as pl
from jax.experimental.pallas import tpu as pltpu


# ----------------------------------------------------------------------------- kernels
def gcn_fused_kernel(a_ref, xw1_ref, b1_ref, w2_ref, b2_ref, out_ref):
    """Small-graph fast path (grid=(1,)): whole padded graph resident in VMEM.

    Padded hidden/class lanes are inert: xw1/W2 padded columns are 0 and padded class
    bias is -1e30, so it never wins the max and its exp underflows to 0.  All softmax
    math stays in f32 (the -1e30 trick requires it).
    """
    a = a_ref[...]                                               # bf16 (n_pad, n_pad)
    h = jnp.dot(a, xw1_ref[...], preferred_element_type=jnp.float32) + b1_ref[...]
    h = jnp.maximum(h, 0.0)                                      # F.relu
    # TODO(synk): training-mode dropout would use pltpu.prng_seed + prng_random_bits.
    hw2 = jnp.dot(h.astype(jnp.bfloat16), w2_ref[...],
                  preferred_element_type=jnp.float32)
    z = jnp.dot(a, hw2.astype(jnp.bfloat16),
                preferred_element_type=jnp.float32) + b2_ref[...]
    m = jnp.max(z, axis=1, keepdims=True)
    lse = jnp.log(jnp.sum(jnp.exp(z - m), axis=1, keepdims=True)) + m
    out_ref[...] = (z - lse).astype(out_ref.dtype)


def gcn_layer1_kernel(a_ref, xw1_ref, b1_ref, w2_ref, hw2_ref, acc_ref):
    """K-tiled layer 1: acc += A[i,k] @ XW1[k]; last k fuses relu and (h @ W2)."""
    k = pl.program_id(1)

    @pl.when(k == 0)
    def _():
        acc_ref[...] = jnp.zeros_like(acc_ref)

    acc_ref[...] += jnp.dot(a_ref[...], xw1_ref[...],
                            preferred_element_type=jnp.float32)

    @pl.when(k == pl.num_programs(1) - 1)
    def _():
        h = jnp.maximum(acc_ref[...] + b1_ref[...], 0.0)         # F.relu
        # TODO(synk): training-mode dropout would mask h here.
        hw2_ref[...] = jnp.dot(
            h.astype(jnp.bfloat16), w2_ref[...],
            preferred_element_type=jnp.float32).astype(hw2_ref.dtype)


def gcn_layer2_kernel(a_ref, hw2_ref, b2_ref, out_ref, acc_ref):
    """K-tiled layer 2: acc += A[i,k] @ HW2[k]; last k adds bias + log_softmax (f32)."""
    k = pl.program_id(1)

    @pl.when(k == 0)
    def _():
        acc_ref[...] = jnp.zeros_like(acc_ref)

    acc_ref[...] += jnp.dot(a_ref[...], hw2_ref[...],
                            preferred_element_type=jnp.float32)

    @pl.when(k == pl.num_programs(1) - 1)
    def _():
        z = acc_ref[...] + b2_ref[...]           # padded classes carry bias = -1e30
        m = jnp.max(z, axis=1, keepdims=True)
        lse = jnp.log(jnp.sum(jnp.exp(z - m), axis=1, keepdims=True)) + m
        out_ref[...] = (z - lse).astype(out_ref.dtype)


# ----------------------------------------------------------------------------- helpers
def _round_up(x, m):
    return (x + m - 1) // m * m


def _default_vmem_limit_bytes():
    """Generation-aware scoped-VMEM request: ~96 MiB on v5e/v6e, ~48 MiB on v7x."""
    try:
        cap = int(pltpu.get_tpu_info().vmem_capacity_bytes)
        return min(100 * 1024 * 1024, (cap * 3) // 4)
    except Exception:  # pragma: no cover - conservative fallback valid on all gens
        return 48 * 1024 * 1024


def prepare_gcn_operands(a_hat, x, w1, b1, w2, b2, n_pad):
    """One-time pad + cast of all operands (cache per graph/params; do NOT redo per
    forward).  X @ W1 is hoisted here (F_in is tiny) so kernels never recompute it."""
    n, _ = x.shape
    hidden = w1.shape[1]
    n_classes = w2.shape[1]
    hp = _round_up(hidden, 128)          # lane-dense hidden dim
    cp = _round_up(n_classes, 128)       # lane-dense class dim

    a_p = jnp.zeros((n_pad, n_pad), jnp.bfloat16).at[:n, :n].set(
        a_hat.astype(jnp.bfloat16))
    xw1 = x.astype(jnp.float32) @ w1.astype(jnp.float32)        # (n, hidden), f32
    xw1_p = jnp.zeros((n_pad, hp), jnp.bfloat16).at[:n, :hidden].set(
        xw1.astype(jnp.bfloat16))
    b1_p = jnp.zeros((1, hp), jnp.float32).at[:, :hidden].set(b1)
    w2_p = jnp.zeros((hp, cp), jnp.bfloat16).at[:hidden, :n_classes].set(
        w2.astype(jnp.bfloat16))
    # padded classes get a huge negative bias so f32 log_softmax ignores them
    b2_p = jnp.full((1, cp), -1e30, jnp.float32).at[:, :n_classes].set(b2)
    return a_p, xw1_p, b1_p, w2_p, b2_p, hp, cp


# ----------------------------------------------------------------------------- wrapper
def gcn_forward(a_hat, x, w1, b1, w2, b2, *, tile_m=512, tile_k=512,
                fuse=None, vmem_limit_bytes=None):
    n = x.shape[0]
    n_classes = w2.shape[1]
    if vmem_limit_bytes is None:
        vmem_limit_bytes = _default_vmem_limit_bytes()

    hp = _round_up(w1.shape[1], 128)
    cp = _round_up(n_classes, 128)

    # ---- decide path: fused single-call iff everything (incl. double buffers) fits
    n_pad_fused = _round_up(n, 8)
    fused_bytes = (2 * (n_pad_fused * n_pad_fused * 2            # A_hat bf16
                        + n_pad_fused * hp * 2                   # XW1 bf16
                        + n_pad_fused * cp * 4)                  # out f32
                   + n_pad_fused * (hp + cp) * 4)                # f32 temporaries
    if fuse is None:
        fuse = fused_bytes <= vmem_limit_bytes // 2

    if fuse:
        # ------------------ small-graph fast path: one fused pallas_call ------------
        n_pad = n_pad_fused
        a_p, xw1_p, b1_p, w2_p, b2_p, hp, cp = prepare_gcn_operands(
            a_hat, x, w1, b1, w2, b2, n_pad)
        full = lambda blk: pl.BlockSpec(blk, lambda i: (0, 0))
        out = pl.pallas_call(
            gcn_fused_kernel,
            out_shape=jax.ShapeDtypeStruct((n_pad, cp), jnp.float32),
            grid=(1,),
            in_specs=[
                full((n_pad, n_pad)),    # A_hat
                full((n_pad, hp)),       # X @ W1
                full((1, hp)),           # b1
                full((hp, cp)),          # W2
                full((1, cp)),           # b2 (padded lanes = -1e30)
            ],
            out_specs=full((n_pad, cp)),
            compiler_params=pltpu.CompilerParams(
                dimension_semantics=("arbitrary",),
                vmem_limit_bytes=vmem_limit_bytes),
            cost_estimate=pl.CostEstimate(
                flops=2 * n_pad * n_pad * (hp + cp) + 2 * n_pad * hp * cp,
                transcendentals=n_pad * (cp + 1),
                bytes_accessed=(n_pad * n_pad * 2 + n_pad * hp * 2
                                + hp * cp * 2 + n_pad * cp * 4)),
        )(a_p, xw1_p, b1_p, w2_p, b2_p)
        return out[:n, :n_classes]

    # ---------------------- large-graph path: two K-tiled pallas_calls --------------
    tm = _round_up(max(8, min(tile_m, n)), 8)        # row tile   (sublane multiple)
    tk = _round_up(max(128, min(tile_k, n)), 128)    # K/col tile (lane multiple)
    n_pad = _round_up(n, math.lcm(tm, tk))
    a_p, xw1_p, b1_p, w2_p, b2_p, hp, cp = prepare_gcn_operands(
        a_hat, x, w1, b1, w2, b2, n_pad)

    grid = (n_pad // tm, n_pad // tk)
    cparams = pltpu.CompilerParams(
        dimension_semantics=("parallel", "arbitrary"),   # rows megacore, K reduction
        vmem_limit_bytes=vmem_limit_bytes)
    a_tile = pl.BlockSpec((tm, tk), lambda i, k: (i, k))
    # tiny resident operands (<= 33 KiB total) -> constant index map
    resident = lambda blk: pl.BlockSpec(blk, lambda i, k: (0, 0))

    # ---- call 1: layer-1 aggregation (+relu) and layer-2 feature transform ----
    hw2 = pl.pallas_call(
        gcn_layer1_kernel,
        out_shape=jax.ShapeDtypeStruct((n_pad, cp), jnp.bfloat16),
        grid=grid,
        in_specs=[
            a_tile,                                      # A_hat (tm, tk)
            pl.BlockSpec((tk, hp), lambda i, k: (k, 0)),  # XW1 K-slice
            resident((1, hp)),                            # b1
            resident((hp, cp)),                           # W2
        ],
        out_specs=pl.BlockSpec((tm, cp), lambda i, k: (i, 0)),
        scratch_shapes=[pltpu.VMEM((tm, hp), jnp.float32)],
        compiler_params=cparams,
        cost_estimate=pl.CostEstimate(
            flops=2 * n_pad * n_pad * hp + 2 * n_pad * hp * cp,
            transcendentals=0,
            bytes_accessed=(n_pad * n_pad * 2 + grid[0] * n_pad * hp * 2
                            + n_pad * cp * 2)),
    )(a_p, xw1_p, b1_p, w2_p)

    # ---- call 2: layer-2 aggregation + bias + log_softmax ----
    out = pl.pallas_call(
        gcn_layer2_kernel,
        out_shape=jax.ShapeDtypeStruct((n_pad, cp), jnp.float32),
        grid=grid,
        in_specs=[
            a_tile,                                      # A_hat (tm, tk)
            pl.BlockSpec((tk, cp), lambda i, k: (k, 0)),  # HW2 K-slice
            resident((1, cp)),                            # b2 (padded lanes = -1e30)
        ],
        out_specs=pl.BlockSpec((tm, cp), lambda i, k: (i, 0)),
        scratch_shapes=[pltpu.VMEM((tm, cp), jnp.float32)],
        compiler_params=cparams,
        cost_estimate=pl.CostEstimate(
            flops=2 * n_pad * n_pad * cp,
            transcendentals=n_pad * (cp + 1),
            bytes_accessed=(n_pad * n_pad * 2 + grid[0] * n_pad * cp * 2
                            + n_pad * cp * 4)),
    )(a_p, hw2, b2_p)

    return out[:n, :n_classes]


# ----------------------------------------------------------------------------- glue
def build_normalized_adjacency(edge_index, num_nodes):
    """Dense equivalent of GCNConv's add_self_loops + gcn_norm:
       A_hat = D^{-1/2} (A + I) D^{-1/2},  A[dst, src] += 1 per edge."""
    src, dst = edge_index[0], edge_index[1]
    a = jnp.zeros((num_nodes, num_nodes), jnp.float32)
    a = a.at[dst, src].add(1.0)                      # message flows src -> dst
    a = a + jnp.eye(num_nodes, dtype=jnp.float32)    # self loops
    deg = jnp.sum(a, axis=1)
    dinv = jnp.where(deg > 0, 1.0 / jnp.sqrt(deg), 0.0)
    return a * dinv[:, None] * dinv[None, :]


def gcn_reference(a_hat, x, w1, b1, w2, b2):
    """Pure-JAX f32 reference for correctness checking."""
    h = jnp.maximum(a_hat @ (x @ w1) + b1, 0.0)
    z = a_hat @ (h @ w2) + b2
    return jax.nn.log_softmax(z, axis=1)


if __name__ == "__main__":
    # ENZYMES: 3 node features, 6 classes. Synthetic graph sized to exercise tiling.
    N_NODES = 256
    F_IN = 3          # dataset.num_node_features
    HIDDEN = 16
    N_CLASSES = 6     # dataset.num_classes
    N_EDGES = 512

    key = jax.random.PRNGKey(0)
    k_x, k_e, k_w1, k_b1, k_w2, k_b2 = jax.random.split(key, 6)

    x = jax.random.normal(k_x, (N_NODES, F_IN), jnp.float32)

    # random undirected edge_index (2, E) -- both directions, like PyG datasets
    e_half = jax.random.randint(k_e, (2, N_EDGES), 0, N_NODES)
    edge_index = jnp.concatenate(
        [e_half, jnp.stack([e_half[1], e_half[0]])], axis=1)

    # parameters (GCNConv: Linear weight without bias + separate bias)
    w1 = jax.random.normal(k_w1, (F_IN, HIDDEN), jnp.float32) * 0.5
    b1 = jax.random.normal(k_b1, (1, HIDDEN), jnp.float32) * 0.1
    w2 = jax.random.normal(k_w2, (HIDDEN, N_CLASSES), jnp.float32) * 0.5
    b2 = jax.random.normal(k_b2, (1, N_CLASSES), jnp.float32) * 0.1

    a_hat = build_normalized_adjacency(edge_index, N_NODES)
    ref = gcn_reference(a_hat, x, w1, b1, w2, b2)

    # --- path 1: small-graph fused fast path (auto-selected for N=256) ---
    out_fused = jax.block_until_ready(gcn_forward(a_hat, x, w1, b1, w2, b2))
    assert out_fused.shape == (N_NODES, N_CLASSES)
    row_sums = jnp.sum(jnp.exp(out_fused), axis=1)
    assert bool(jnp.all(jnp.abs(row_sums - 1.0) < 1e-3)), "fused: row sums off"
    err_fused = float(jnp.max(jnp.abs(out_fused - ref)))
    assert err_fused < 0.15, f"fused mismatch vs reference: {err_fused}"

    # --- path 2: large-graph K-tiled path, forced with small tiles (grid 2x2) ---
    out_tiled = jax.block_until_ready(
        gcn_forward(a_hat, x, w1, b1, w2, b2, tile_m=128, tile_k=128, fuse=False))
    assert out_tiled.shape == (N_NODES, N_CLASSES)
    row_sums_t = jnp.sum(jnp.exp(out_tiled), axis=1)
    assert bool(jnp.all(jnp.abs(row_sums_t - 1.0) < 1e-3)), "tiled: row sums off"
    err_tiled = float(jnp.max(jnp.abs(out_tiled - ref)))
    assert err_tiled < 0.15, f"tiled mismatch vs reference: {err_tiled}"

    print("KERNEL_OK")
</pallas_src>

<mosaic_0001>
module attributes {stable_mosaic.version = 11 : i64} {
  func.func @gcn_fused_kernel(%arg0: i32, %arg1: memref<256x256xbf16, #tpu.memory_space<vmem>>, %arg2: memref<256x128xbf16, #tpu.memory_space<vmem>>, %arg3: memref<1x128xf32, #tpu.memory_space<vmem>>, %arg4: memref<128x128xbf16, #tpu.memory_space<vmem>>, %arg5: memref<1x128xf32, #tpu.memory_space<vmem>>, %arg6: memref<256x128xf32, #tpu.memory_space<vmem>>) attributes {dimension_semantics = [#tpu.dimension_semantics<arbitrary>], iteration_bounds = array<i64: 1>, scalar_prefetch = 0 : i64, scratch_operands = 0 : i64, tpu.core_type = #tpu.core_type<tc>, window_params = [{pipeline_mode = #tpu.pipeline_mode<synchronous>, transform_indices = @transform_0, window_bounds = array<i64: 256, 256>}, {pipeline_mode = #tpu.pipeline_mode<synchronous>, transform_indices = @transform_1, window_bounds = array<i64: 256, 128>}, {pipeline_mode = #tpu.pipeline_mode<synchronous>, transform_indices = @transform_2, window_bounds = array<i64: 1, 128>}, {pipeline_mode = #tpu.pipeline_mode<synchronous>, transform_indices = @transform_3, window_bounds = array<i64: 128, 128>}, {pipeline_mode = #tpu.pipeline_mode<synchronous>, transform_indices = @transform_4, window_bounds = array<i64: 1, 128>}, {pipeline_mode = #tpu.pipeline_mode<synchronous>, transform_indices = @transform_5, window_bounds = array<i64: 256, 128>}]} {
    %c0 = arith.constant 0 : index
    %c0_0 = arith.constant 0 : index
    %0 = vector.load %arg1[%c0, %c0_0] : memref<256x256xbf16, #tpu.memory_space<vmem>>, vector<256x256xbf16>
    %c0_1 = arith.constant 0 : index
    %c0_2 = arith.constant 0 : index
    %1 = vector.load %arg2[%c0_1, %c0_2] : memref<256x128xbf16, #tpu.memory_space<vmem>>, vector<256x128xbf16>
    %cst = arith.constant dense<0.000000e+00> : vector<256x128xf32>
    %2 = tpu.matmul %0, %1, %cst {dimension_numbers = #tpu.dot_dimension_numbers<[1], [0], [0], [1], [0, 0, 1, 1], [], []>} : vector<256x256xbf16>, vector<256x128xbf16>, vector<256x128xf32> -> vector<256x128xf32>
    %c0_3 = arith.constant 0 : index
    %c0_4 = arith.constant 0 : index
    %3 = vector.load %arg3[%c0_3, %c0_4] : memref<1x128xf32, #tpu.memory_space<vmem>>, vector<1x128xf32>
    %4 = vector.broadcast %3 : vector<1x128xf32> to vector<256x128xf32>
    %5 = arith.addf %2, %4 : vector<256x128xf32>
    %cst_5 = arith.constant 0.000000e+00 : f32
    %6 = vector.broadcast %cst_5 : f32 to vector<256x128xf32>
    %7 = arith.maximumf %5, %6 : vector<256x128xf32>
    %8 = arith.truncf %7 : vector<256x128xf32> to vector<256x128xbf16>
    %c0_6 = arith.constant 0 : index
    %c0_7 = arith.constant 0 : index
    %9 = vector.load %arg4[%c0_6, %c0_7] : memref<128x128xbf16, #tpu.memory_space<vmem>>, vector<128x128xbf16>
    %cst_8 = arith.constant dense<0.000000e+00> : vector<256x128xf32>
    %10 = tpu.matmul %8, %9, %cst_8 {dimension_numbers = #tpu.dot_dimension_numbers<[1], [0], [0], [1], [0, 0, 1, 1], [], []>} : vector<256x128xbf16>, vector<128x128xbf16>, vector<256x128xf32> -> vector<256x128xf32>
    %11 = arith.truncf %10 : vector<256x128xf32> to vector<256x128xbf16>
    %cst_9 = arith.constant dense<0.000000e+00> : vector<256x128xf32>
    %12 = tpu.matmul %0, %11, %cst_9 {dimension_numbers = #tpu.dot_dimension_numbers<[1], [0], [0], [1], [0, 0, 1, 1], [], []>} : vector<256x256xbf16>, vector<256x128xbf16>, vector<256x128xf32> -> vector<256x128xf32>
    %c0_10 = arith.constant 0 : index
    %c0_11 = arith.constant 0 : index
    %13 = vector.load %arg5[%c0_10, %c0_11] : memref<1x128xf32, #tpu.memory_space<vmem>>, vector<1x128xf32>
    %14 = vector.broadcast %13 : vector<1x128xf32> to vector<256x128xf32>
    %15 = arith.addf %12, %14 : vector<256x128xf32>
    %cst_12 = arith.constant dense<0xFF800000> : vector<256xf32>
    %16 = vector.multi_reduction <maximumf>, %15, %cst_12 [1] : vector<256x128xf32> to vector<256xf32>
    %17 = vector.shape_cast %16 : vector<256xf32> to vector<256x1xf32>
    %18 = vector.broadcast %17 : vector<256x1xf32> to vector<256x128xf32>
    %19 = arith.subf %15, %18 : vector<256x128xf32>
    %20 = math.exp %19 : vector<256x128xf32>
    %cst_13 = arith.constant dense<0.000000e+00> : vector<256xf32>
    %21 = vector.multi_reduction <add>, %20, %cst_13 [1] : vector<256x128xf32> to vector<256xf32>
    %22 = vector.shape_cast %21 : vector<256xf32> to vector<256x1xf32>
    %23 = math.log %22 : vector<256x1xf32>
    %24 = arith.addf %23, %17 : vector<256x1xf32>
    %25 = vector.broadcast %24 : vector<256x1xf32> to vector<256x128xf32>
    %26 = arith.subf %15, %25 : vector<256x128xf32>
    %c0_14 = arith.constant 0 : index
    %c0_15 = arith.constant 0 : index
    %27 = vector.load %arg6[%c0_14, %c0_15] : memref<256x128xf32, #tpu.memory_space<vmem>>, vector<256x128xf32>
    tpu.vector_store %arg6[%c0_14, %c0_15], %26 {strides = array<i32>} : memref<256x128xf32, #tpu.memory_space<vmem>>, vector<256x128xf32>,
    return
  }
  func.func @transform_0(%arg0: i32) -> (i32, i32) {
    %c0_i32 = arith.constant 0 : i32
    %c0_i32_0 = arith.constant 0 : i32
    %c0_i32_1 = arith.constant 0 : i32
    return %c0_i32, %c0_i32_0 : i32, i32
  }
  func.func @transform_1(%arg0: i32) -> (i32, i32) {
    %c0_i32 = arith.constant 0 : i32
    %c0_i32_0 = arith.constant 0 : i32
    %c0_i32_1 = arith.constant 0 : i32
    return %c0_i32, %c0_i32_0 : i32, i32
  }
  func.func @transform_2(%arg0: i32) -> (i32, i32) {
    %c0_i32 = arith.constant 0 : i32
    %c0_i32_0 = arith.constant 0 : i32
    %c0_i32_1 = arith.constant 0 : i32
    return %c0_i32, %c0_i32_0 : i32, i32
  }
  func.func @transform_3(%arg0: i32) -> (i32, i32) {
    %c0_i32 = arith.constant 0 : i32
    %c0_i32_0 = arith.constant 0 : i32
    %c0_i32_1 = arith.constant 0 : i32
    return %c0_i32, %c0_i32_0 : i32, i32
  }
  func.func @transform_4(%arg0: i32) -> (i32, i32) {
    %c0_i32 = arith.constant 0 : i32
    %c0_i32_0 = arith.constant 0 : i32
    %c0_i32_1 = arith.constant 0 : i32
    return %c0_i32, %c0_i32_0 : i32, i32
  }
  func.func @transform_5(%arg0: i32) -> (i32, i32) {
    %c0_i32 = arith.constant 0 : i32
    %c0_i32_0 = arith.constant 0 : i32
    %c0_i32_1 = arith.constant 0 : i32
    return %c0_i32, %c0_i32_0 : i32, i32
  }
}

</mosaic_0001>

<llo_original>
// kernel: tpu_custom_call.1
$region0: #{tpu_custom_call.1}
  #allocation0 [shape = 'u32[]', space=smem, size = 0x4, offset = 0x4, fixed_abs, tag = 'smem constant byte address 0x4 - core index']
  #allocation1 [shape = 'u32[144,128]{1,0:T(1,128)}', space=vmem, size = 0x12000, scoped, tag = 'internal scratch']
  %s0 = inlined_call_operand.hbm [shape: bf16[256,256], index: 0, kind: input, shape index: {}]
  %s1 = inlined_call_operand.hbm [shape: bf16[256,128], index: 1, kind: input, shape index: {}]
  %s2 = inlined_call_operand.vmem [shape: f32[1,128], index: 2, kind: input, shape index: {}]
  %s3 = inlined_call_operand.hbm [shape: bf16[128,128], index: 3, kind: input, shape index: {}]
  %s4 = inlined_call_operand.vmem [shape: f32[1,128], index: 4, kind: input, shape index: {}]
  %s5 = inlined_call_operand.hbm [shape: f32[256,128], index: 5, kind: output, shape index: {}]
  %s6 = sld [smem:[#allocation0]]
  $region42: #{tpu_custom_call.1} parent=0
    _
  %s8 = ssub.s32 1, %s6
  %s9 = scalar_select 0, %s8, %s6
  $region1: #{tpu_custom_call.1} parent=0
    #allocation2 [shape = 'u8[131072]{0}', space=vmem, size = 0x20000, scoped, tag = 'input window, operand 0, single buffered']
    #allocation3 [shape = 's32[1]{0}', space=sflag, size = 0x4, scoped, tag = 'scoped memory for tpu_custom_call.1']
    #allocation4 [shape = 's32[1]{0}', space=sflag, size = 0x4, scoped, tag = 'scoped memory for tpu_custom_call.1']
    #allocation5 [shape = 'u8[65536]{0}', space=vmem, size = 0x10000, scoped, tag = 'input window, operand 1, single buffered']
    #allocation6 [shape = 's32[1]{0}', space=sflag, size = 0x4, scoped, tag = 'scoped memory for tpu_custom_call.1']
    #allocation7 [shape = 'u8[32768]{0}', space=vmem, size = 0x8000, scoped, tag = 'input window, operand 3, single buffered']
    #allocation8 [shape = 'u8[131072]{0}', space=vmem, size = 0x20000, scoped, tag = 'output window, operand 0, single buffered']
    %10 = vsyncpa [#allocation3], 0
    %11 = vsyncpa [#allocation6], 0
    %12 = vsyncpa [#allocation4], 0
    // Predicated region
    $region2: #{tpu_custom_call.1} parent=1 // pred_check
      _
    $region3: #{tpu_custom_call.1} parent=1 // pred_check_branch
      %14 = sbr.rel (0) target = $region5
    $region4: #{tpu_custom_call.1} parent=1 // pred_region
      %s16 = ssub.s32 4096, 4096
      %17 = vsyncadd [#allocation3], %s16
      %s18 = sshll.u32 [#allocation2], 4
      %s19 = int_to_ptr.vmem [resolvable:$true] %s18
      %24 = dma.hbm_to_vmem [thread:$0]  %s0, 4096, %s19, [#allocation3], 128, 128, 8
    $region5: #{tpu_custom_call.1} parent=1 // pred_fallthru
      _
    // Predicated region
    $region6: #{tpu_custom_call.1} parent=1 // pred_check
      _
    $region7: #{tpu_custom_call.1} parent=1 // pred_check_branch
      %26 = sbr.rel (0) target = $region9
    $region8: #{tpu_custom_call.1} parent=1 // pred_region
      %s28 = ssub.s32 2048, 2048
      %29 = vsyncadd [#allocation6], %s28
      %s30 = sshll.u32 [#allocation5], 4
      %s31 = int_to_ptr.vmem [resolvable:$true] %s30
      %36 = dma.hbm_to_vmem [thread:$0]  %s1, 2048, %s31, [#allocation6], 64, 64, 4
    $region9: #{tpu_custom_call.1} parent=1 // pred_fallthru
      _
    // Predicated region
    $region10: #{tpu_custom_call.1} parent=1 // pred_check
      _
    $region11: #{tpu_custom_call.1} parent=1 // pred_check_branch
      %38 = sbr.rel (0) target = $region13
    $region12: #{tpu_custom_call.1} parent=1 // pred_region
      _
    $region13: #{tpu_custom_call.1} parent=1 // pred_fallthru
      _
    // Predicated region
    $region14: #{tpu_custom_call.1} parent=1 // pred_check
      _
    $region15: #{tpu_custom_call.1} parent=1 // pred_check_branch
      %40 = sbr.rel (0) target = $region17
    $region16: #{tpu_custom_call.1} parent=1 // pred_region
      %s42 = ssub.s32 1024, 1024
      %43 = vsyncadd [#allocation6], %s42
      %s44 = sshll.u32 [#allocation7], 4
      %s45 = int_to_ptr.vmem [resolvable:$true] %s44
      %50 = dma.hbm_to_vmem [thread:$0]  %s3, 1024, %s45, [#allocation6], 64, 64, 4
    $region17: #{tpu_custom_call.1} parent=1 // pred_fallthru
      _
    // Predicated region
    $region18: #{tpu_custom_call.1} parent=1 // pred_check
      _
    $region19: #{tpu_custom_call.1} parent=1 // pred_check_branch
      %52 = sbr.rel (0) target = $region21
    $region20: #{tpu_custom_call.1} parent=1 // pred_region
      _
    $region21: #{tpu_custom_call.1} parent=1 // pred_fallthru
      _
    // Predicated region
    $region22: #{tpu_custom_call.1} parent=1 // pred_check
      _
    $region23: #{tpu_custom_call.1} parent=1 // pred_check_branch
      %54 = sbr.rel (0) target = $region25
    $region24: #{tpu_custom_call.1} parent=1 // pred_region
      %55 = dma.done [#allocation3], 4096
    $region25: #{tpu_custom_call.1} parent=1 // pred_fallthru
      _
    // Predicated region
    $region26: #{tpu_custom_call.1} parent=1 // pred_check
      _
    $region27: #{tpu_custom_call.1} parent=1 // pred_check_branch
      %57 = sbr.rel (0) target = $region29
    $region28: #{tpu_custom_call.1} parent=1 // pred_region
      %58 = dma.done [#allocation6], 2048
    $region29: #{tpu_custom_call.1} parent=1 // pred_fallthru
      _
    // Predicated region
    $region30: #{tpu_custom_call.1} parent=1 // pred_check
      _
    $region31: #{tpu_custom_call.1} parent=1 // pred_check_branch
      %60 = sbr.rel (0) target = $region33
    $region32: #{tpu_custom_call.1} parent=1 // pred_region
      %61 = dma.done [#allocation6], 1024
    $region33: #{tpu_custom_call.1} parent=1 // pred_fallthru
      _
    %v63 = vld [vmem:[#allocation2] sm:$0xff]
    %v64 = vld [vmem:[#allocation2 + $0x8] sm:$0xff]
    %v65 = vld [vmem:[#allocation2 + $0x10] sm:$0xff]
    %v66 = vld [vmem:[#allocation2 + $0x18] sm:$0xff]
    %v67 = vld [vmem:[#allocation2 + $0x20] sm:$0xff]
    %v68 = vld [vmem:[#allocation2 + $0x28] sm:$0xff]
    %v69 = vld [vmem:[#allocation2 + $0x30] sm:$0xff]
    %v70 = vld [vmem:[#allocation2 + $0x38] sm:$0xff]
    %v71 = vld [vmem:[#allocation2 + $0x40] sm:$0xff]
    %v72 = vld [vmem:[#allocation2 + $0x48] sm:$0xff]
    %v73 = vld [vmem:[#allocation2 + $0x50] sm:$0xff]
    %v74 = vld [vmem:[#allocation2 + $0x58] sm:$0xff]
    %v75 = vld [vmem:[#allocation2 + $0x60] sm:$0xff]
    %v76 = vld [vmem:[#allocation2 + $0x68] sm:$0xff]
    %v77 = vld [vmem:[#allocation2 + $0x70] sm:$0xff]
    %v78 = vld [vmem:[#allocation2 + $0x78] sm:$0xff]
    %v79 = vld [vmem:[#allocation2 + $0x80] sm:$0xff]
    %v80 = vld [vmem:[#allocation2 + $0x88] sm:$0xff]
    %v81 = vld [vmem:[#allocation2 + $0x90] sm:$0xff]
    %v82 = vld [vmem:[#allocation2 + $0x98] sm:$0xff]
    %v83 = vld [vmem:[#allocation2 + $0xa0] sm:$0xff]
    %v84 = vld [vmem:[#allocation2 + $0xa8] sm:$0xff]
    %v85 = vld [vmem:[#allocation2 + $0xb0] sm:$0xff]
    %v86 = vld [vmem:[#allocation2 + $0xb8] sm:$0xff]
    %v87 = vld [vmem:[#allocation2 + $0xc0] sm:$0xff]
    %v88 = vld [vmem:[#allocation2 + $0xc8] sm:$0xff]
    %v89 = vld [vmem:[#allocation2 + $0xd0] sm:$0xff]
    %v90 = vld [vmem:[#allocation2 + $0xd8] sm:$0xff]
    %v91 = vld [vmem:[#allocation2 + $0xe0] sm:$0xff]
    %v92 = vld [vmem:[#allocation2 + $0xe8] sm:$0xff]
    %v93 = vld [vmem:[#allocation2 + $0xf0] sm:$0xff]
    %v94 = vld [vmem:[#allocation2 + $0xf8] sm:$0xff]
    %v95 = vld [vmem:[#allocation5] sm:$0xf]
    %v96 = vld [vmem:[#allocation5 + $0x4] sm:$0xf]
    %v97 = vld [vmem:[#allocation5 + $0x8] sm:$0xf]
    %v98 = vld [vmem:[#allocation5 + $0xc] sm:$0xf]
    %v99 = vld [vmem:[#allocation5 + $0x10] sm:$0xf]
    %v100 = vld [vmem:[#allocation5 + $0x14] sm:$0xf]
    %v101 = vld [vmem:[#allocation5 + $0x18] sm:$0xf]
    %v102 = vld [vmem:[#allocation5 + $0x1c] sm:$0xf]
    %v103 = vld [vmem:[#allocation5 + $0x20] sm:$0xf]
    %v104 = vld [vmem:[#allocation5 + $0x24] sm:$0xf]
    %v105 = vld [vmem:[#allocation5 + $0x28] sm:$0xf]
    %v106 = vld [vmem:[#allocation5 + $0x2c] sm:$0xf]
    %v107 = vld [vmem:[#allocation5 + $0x30] sm:$0xf]
    %v108 = vld [vmem:[#allocation5 + $0x34] sm:$0xf]
    %v109 = vld [vmem:[#allocation5 + $0x38] sm:$0xf]
    %v110 = vld [vmem:[#allocation5 + $0x3c] sm:$0xf]
    %v111 = vld [vmem:[#allocation5 + $0x40] sm:$0xf]
    %v112 = vld [vmem:[#allocation5 + $0x44] sm:$0xf]
    %v113 = vld [vmem:[#allocation5 + $0x48] sm:$0xf]
    %v114 = vld [vmem:[#allocation5 + $0x4c] sm:$0xf]
    %v115 = vld [vmem:[#allocation5 + $0x50] sm:$0xf]
    %v116 = vld [vmem:[#allocation5 + $0x54] sm:$0xf]
    %v117 = vld [vmem:[#allocation5 + $0x58] sm:$0xf]
    %v118 = vld [vmem:[#allocation5 + $0x5c] sm:$0xf]
    %v119 = vld [vmem:[#allocation5 + $0x60] sm:$0xf]
    %v120 = vld [vmem:[#allocation5 + $0x64] sm:$0xf]
    %v121 = vld [vmem:[#allocation5 + $0x68] sm:$0xf]
    %v122 = vld [vmem:[#allocation5 + $0x6c] sm:$0xf]
    %v123 = vld [vmem:[#allocation5 + $0x70] sm:$0xf]
    %v124 = vld [vmem:[#allocation5 + $0x74] sm:$0xf]
    %v125 = vld [vmem:[#allocation5 + $0x78] sm:$0xf]
    %v126 = vld [vmem:[#allocation5 + $0x7c] sm:$0xf]
    %v127 = vld [vmem:[%s2] sm:$0x1]
    %v129 = vlaneseq
    %v130 = vshrl.u32 %v129, 7
    %v131 = vsub.s32 0, %v130
    %v132 = vrot.slane %v127, %v131
    %v166 = vunpack.c.l.b16 %v63
    %v167 = vunpack.c.h.b16 %v63
    %v168 = vunpack.c.l.b16 %v64
    %v169 = vunpack.c.h.b16 %v64
    %v170 = vunpack.c.l.b16 %v65
    %v171 = vunpack.c.h.b16 %v65
    %v172 = vunpack.c.l.b16 %v66
    %v173 = vunpack.c.h.b16 %v66
    %v174 = vunpack.c.l.b16 %v67
    %v175 = vunpack.c.h.b16 %v67
    %v176 = vunpack.c.l.b16 %v68
    %v177 = vunpack.c.h.b16 %v68
    %v178 = vunpack.c.l.b16 %v69
    %v179 = vunpack.c.h.b16 %v69
    %v180 = vunpack.c.l.b16 %v70
    %v181 = vunpack.c.h.b16 %v70
    %v182 = vunpack.c.l.b16 %v71
    %v183 = vunpack.c.h.b16 %v71
    %v184 = vunpack.c.l.b16 %v72
    %v185 = vunpack.c.h.b16 %v72
    %v186 = vunpack.c.l.b16 %v73
    %v187 = vunpack.c.h.b16 %v73
    %v188 = vunpack.c.l.b16 %v74
    %v189 = vunpack.c.h.b16 %v74
    %v190 = vunpack.c.l.b16 %v75
    %v191 = vunpack.c.h.b16 %v75
    %v192 = vunpack.c.l.b16 %v76
    %v193 = vunpack.c.h.b16 %v76
    %v194 = vunpack.c.l.b16 %v77
    %v195 = vunpack.c.h.b16 %v77
    %v196 = vunpack.c.l.b16 %v78
    %v197 = vunpack.c.h.b16 %v78
    %v198 = vunpack.c.l.b16 %v79
    %v199 = vunpack.c.h.b16 %v79
    %v200 = vunpack.c.l.b16 %v80
    %v201 = vunpack.c.h.b16 %v80
    %v202 = vunpack.c.l.b16 %v81
    %v203 = vunpack.c.h.b16 %v81
    %v204 = vunpack.c.l.b16 %v82
    %v205 = vunpack.c.h.b16 %v82
    %v206 = vunpack.c.l.b16 %v83
    %v207 = vunpack.c.h.b16 %v83
    %v208 = vunpack.c.l.b16 %v84
    %v209 = vunpack.c.h.b16 %v84
    %v210 = vunpack.c.l.b16 %v85
    %v211 = vunpack.c.h.b16 %v85
    %v212 = vunpack.c.l.b16 %v86
    %v213 = vunpack.c.h.b16 %v86
    %v214 = vunpack.c.l.b16 %v87
    %v215 = vunpack.c.h.b16 %v87
    %v216 = vunpack.c.l.b16 %v88
    %v217 = vunpack.c.h.b16 %v88
    %v218 = vunpack.c.l.b16 %v89
    %v219 = vunpack.c.h.b16 %v89
    %v220 = vunpack.c.l.b16 %v90
    %v221 = vunpack.c.h.b16 %v90
    %v222 = vunpack.c.l.b16 %v91
    %v223 = vunpack.c.h.b16 %v91
    %v224 = vunpack.c.l.b16 %v92
    %v225 = vunpack.c.h.b16 %v92
    %v226 = vunpack.c.l.b16 %v93
    %v227 = vunpack.c.h.b16 %v93
    %v228 = vunpack.c.l.b16 %v94
    %v229 = vunpack.c.h.b16 %v94
    %v230 = vpack.c.b16 %v168, %v166
    %v231 = vpack.c.b16 %v169, %v167
    %v232 = vpack.c.b16 %v172, %v170
    %v233 = vpack.c.b16 %v173, %v171
    %v234 = vpack.c.b16 %v176, %v174
    %v235 = vpack.c.b16 %v177, %v175
    %v236 = vpack.c.b16 %v180, %v178
    %v237 = vpack.c.b16 %v181, %v179
    %v238 = vpack.c.b16 %v184, %v182
    %v239 = vpack.c.b16 %v185, %v183
    %v240 = vpack.c.b16 %v188, %v186
    %v241 = vpack.c.b16 %v189, %v187
    %v242 = vpack.c.b16 %v192, %v190
    %v243 = vpack.c.b16 %v193, %v191
    %v244 = vpack.c.b16 %v196, %v194
    %v245 = vpack.c.b16 %v197, %v195
    %v246 = vpack.c.b16 %v200, %v198
    %v247 = vpack.c.b16 %v201, %v199
    %v248 = vpack.c.b16 %v204, %v202
    %v249 = vpack.c.b16 %v205, %v203
    %v250 = vpack.c.b16 %v208, %v206
    %v251 = vpack.c.b16 %v209, %v207
    %v252 = vpack.c.b16 %v212, %v210
    %v253 = vpack.c.b16 %v213, %v211
    %v254 = vpack.c.b16 %v216, %v214
    %v255 = vpack.c.b16 %v217, %v215
    %v256 = vpack.c.b16 %v220, %v218
    %v257 = vpack.c.b16 %v221, %v219
    %v258 = vpack.c.b16 %v224, %v222
    %v259 = vpack.c.b16 %v225, %v223
    %v260 = vpack.c.b16 %v228, %v226
    %v261 = vpack.c.b16 %v229, %v227
    %v326 = vunpack.c.l.b16 %v95
    %v327 = vunpack.c.l.b16 %v96
    %v328 = vunpack.c.l.b16 %v97
    %v329 = vunpack.c.l.b16 %v98
    %v330 = vunpack.c.l.b16 %v99
    %v331 = vunpack.c.l.b16 %v100
    %v332 = vunpack.c.l.b16 %v101
    %v333 = vunpack.c.l.b16 %v102
    %v334 = vunpack.c.l.b16 %v103
    %v335 = vunpack.c.l.b16 %v104
    %v336 = vunpack.c.l.b16 %v105
    %v337 = vunpack.c.l.b16 %v106
    %v338 = vunpack.c.l.b16 %v107
    %v339 = vunpack.c.l.b16 %v108
    %v340 = vunpack.c.l.b16 %v109
    %v341 = vunpack.c.l.b16 %v110
    %v342 = vunpack.c.l.b16 %v111
    %v343 = vunpack.c.l.b16 %v112
    %v344 = vunpack.c.l.b16 %v113
    %v345 = vunpack.c.l.b16 %v114
    %v346 = vunpack.c.l.b16 %v115
    %v347 = vunpack.c.l.b16 %v116
    %v348 = vunpack.c.l.b16 %v117
    %v349 = vunpack.c.l.b16 %v118
    %v350 = vunpack.c.l.b16 %v119
    %v351 = vunpack.c.l.b16 %v120
    %v352 = vunpack.c.l.b16 %v121
    %v353 = vunpack.c.l.b16 %v122
    %v354 = vunpack.c.l.b16 %v123
    %v355 = vunpack.c.l.b16 %v124
    %v356 = vunpack.c.l.b16 %v125
    %v357 = vunpack.c.l.b16 %v126
    %v358 = vpack.c.b16 %v327, %v326
    %v359 = vpack.c.b16 %v329, %v328
    %v360 = vpack.c.b16 %v331, %v330
    %v361 = vpack.c.b16 %v333, %v332
    %v362 = vpack.c.b16 %v335, %v334
    %v363 = vpack.c.b16 %v337, %v336
    %v364 = vpack.c.b16 %v339, %v338
    %v365 = vpack.c.b16 %v341, %v340
    %v366 = vpack.c.b16 %v343, %v342
    %v367 = vpack.c.b16 %v345, %v344
    %v368 = vpack.c.b16 %v347, %v346
    %v369 = vpack.c.b16 %v349, %v348
    %v370 = vpack.c.b16 %v351, %v350
    %v371 = vpack.c.b16 %v353, %v352
    %v372 = vpack.c.b16 %v355, %v354
    %v373 = vpack.c.b16 %v357, %v356
    %390 = vmatprep.subr.bf16.mxu0 0
    %391 = vmatpush1.bf16.msra.mxu0 %v358
    %392 = vmatprep.subr.bf16.mxu0 0
    %393 = vmatpush1.bf16.msra.mxu0 %v359
    %394 = vmatprep.subr.bf16.mxu0 0
    %395 = vmatpush1.bf16.msra.mxu0 %v360
    %396 = vmatprep.subr.bf16.mxu0 0
    %397 = vmatpush1.bf16.msra.mxu0 %v361
    %398 = vmatprep.subr.bf16.mxu0 0
    %399 = vmatpush1.bf16.msra.mxu0 %v362
    %400 = vmatprep.subr.bf16.mxu0 0
    %401 = vmatpush1.bf16.msra.mxu0 %v363
    %402 = vmatprep.subr.bf16.mxu0 0
    %403 = vmatpush1.bf16.msra.mxu0 %v364
    %404 = vmatprep.subr.bf16.mxu0 0
    %405 = vmatpush1.bf16.msra.mxu0 %v365
    %406 = vmatprep.subr.bf16.mxu0 0
    %407 = vmatpush1.bf16.msra.mxu0 %v366
    %408 = vmatprep.subr.bf16.mxu0 0
    %409 = vmatpush1.bf16.msra.mxu0 %v367
    %410 = vmatprep.subr.bf16.mxu0 0
    %411 = vmatpush1.bf16.msra.mxu0 %v368
    %412 = vmatprep.subr.bf16.mxu0 0
    %413 = vmatpush1.bf16.msra.mxu0 %v369
    %414 = vmatprep.subr.bf16.mxu0 0
    %415 = vmatpush1.bf16.msra.mxu0 %v370
    %416 = vmatprep.subr.bf16.mxu0 0
    %417 = vmatpush1.bf16.msra.mxu0 %v371
    %418 = vmatprep.subr.bf16.mxu0 0
    %419 = vmatpush1.bf16.msra.mxu0 %v372
    %420 = vmatprep.subr.bf16.mxu0 0
    %421 = vmatpush1.bf16.msra.mxu0 %v373
    %422 = vmatprep.mubr.bf16.mxu0 %v231
    %423 = vmatmul.mubr.bf16.gmra.mrb[0].mxu0 %v230
    %v424 = vpop.f32.mrb[0].mxu0
    %v425 = vadd.f32 %v132, %v424
    %v426 = vpop.f32.mrb[0].mxu0
    %v427 = vpop.f32.mrb[0].mxu0
    %v428 = vadd.f32 %v132, %v427
    %v429 = vpop.f32.mrb[0].mxu0
    %430 = vmatprep.mubr.bf16.mxu0 %v233
    %431 = vmatmul.mubr.bf16.gmra.mrb[0].mxu0 %v232
    %v432 = vpop.f32.mrb[0].mxu0
    %v433 = vadd.f32 %v132, %v432
    %v434 = vpop.f32.mrb[0].mxu0
    %v435 = vpop.f32.mrb[0].mxu0
    %v436 = vadd.f32 %v132, %v435
    %v437 = vpop.f32.mrb[0].mxu0
    %438 = vmatprep.mubr.bf16.mxu0 %v235
    %439 = vmatmul.mubr.bf16.gmra.mrb[0].mxu0 %v234
    %v440 = vpop.f32.mrb[0].mxu0
    %v441 = vadd.f32 %v132, %v440
    %v442 = vpop.f32.mrb[0].mxu0
    %v443 = vpop.f32.mrb[0].mxu0
    %v444 = vadd.f32 %v132, %v443
    %v445 = vpop.f32.mrb[0].mxu0
    %446 = vmatprep.mubr.bf16.mxu0 %v237
    %447 = vmatmul.mubr.bf16.gmra.mrb[0].mxu0 %v236
    %v448 = vpop.f32.mrb[0].mxu0
    %v449 = vadd.f32 %v132, %v448
    %v450 = vpop.f32.mrb[0].mxu0
    %v451 = vpop.f32.mrb[0].mxu0
    %v452 = vadd.f32 %v132, %v451
    %v453 = vpop.f32.mrb[0].mxu0
    %454 = vmatprep.mubr.bf16.mxu0 %v239
    %455 = vmatmul.mubr.bf16.gmra.mrb[0].mxu0 %v238
    %v456 = vpop.f32.mrb[0].mxu0
    %v457 = vadd.f32 %v132, %v456
    %v458 = vpop.f32.mrb[0].mxu0
    %v459 = vpop.f32.mrb[0].mxu0
    %v460 = vadd.f32 %v132, %v459
    %v461 = vpop.f32.mrb[0].mxu0
    %462 = vmatprep.mubr.bf16.mxu0 %v241
    %463 = vmatmul.mubr.bf16.gmra.mrb[0].mxu0 %v240
    %v464 = vpop.f32.mrb[0].mxu0
    %v465 = vadd.f32 %v132, %v464
    %v466 = vpop.f32.mrb[0].mxu0
    %v467 = vpop.f32.mrb[0].mxu0
    %v468 = vadd.f32 %v132, %v467
    %v469 = vpop.f32.mrb[0].mxu0
    %470 = vmatprep.mubr.bf16.mxu0 %v243
    %471 = vmatmul.mubr.bf16.gmra.mrb[0].mxu0 %v242
    %v472 = vpop.f32.mrb[0].mxu0
    %v473 = vadd.f32 %v132, %v472
    %v474 = vpop.f32.mrb[0].mxu0
    %v475 = vpop.f32.mrb[0].mxu0
    %v476 = vadd.f32 %v132, %v475
    %v477 = vpop.f32.mrb[0].mxu0
    %478 = vmatprep.mubr.bf16.mxu0 %v245
    %479 = vmatmul.mubr.bf16.gmra.mrb[0].mxu0 %v244
    %v480 = vpop.f32.mrb[0].mxu0
    %v481 = vadd.f32 %v132, %v480
    %v482 = vpop.f32.mrb[0].mxu0
    %v483 = vpop.f32.mrb[0].mxu0
    %v484 = vadd.f32 %v132, %v483
    %v485 = vpop.f32.mrb[0].mxu0
    %486 = vmatprep.mubr.bf16.mxu0 %v247
    %487 = vmatmul.mubr.bf16.gmra.mrb[0].mxu0 %v246
    %v488 = vpop.f32.mrb[0].mxu0
    %v489 = vadd.f32 %v132, %v488
    %v490 = vpop.f32.mrb[0].mxu0
    %v491 = vpop.f32.mrb[0].mxu0
    %v492 = vadd.f32 %v132, %v491
    %v493 = vpop.f32.mrb[0].mxu0
    %494 = vmatprep.mubr.bf16.mxu0 %v249
    %495 = vmatmul.mubr.bf16.gmra.mrb[0].mxu0 %v248
    %v496 = vpop.f32.mrb[0].mxu0
    %v497 = vadd.f32 %v132, %v496
    %v498 = vpop.f32.mrb[0].mxu0
    %v499 = vpop.f32.mrb[0].mxu0
    %v500 = vadd.f32 %v132, %v499
    %v501 = vpop.f32.mrb[0].mxu0
    %502 = vmatprep.mubr.bf16.mxu0 %v251
    %503 = vmatmul.mubr.bf16.gmra.mrb[0].mxu0 %v250
    %v504 = vpop.f32.mrb[0].mxu0
    %v505 = vadd.f32 %v132, %v504
    %v506 = vpop.f32.mrb[0].mxu0
    %v507 = vpop.f32.mrb[0].mxu0
    %v508 = vadd.f32 %v132, %v507
    %v509 = vpop.f32.mrb[0].mxu0
    %510 = vmatprep.mubr.bf16.mxu0 %v253
    %511 = vmatmul.mubr.bf16.gmra.mrb[0].mxu0 %v252
    %v512 = vpop.f32.mrb[0].mxu0
    %v513 = vadd.f32 %v132, %v512
    %v514 = vpop.f32.mrb[0].mxu0
    %v515 = vpop.f32.mrb[0].mxu0
    %v516 = vadd.f32 %v132, %v515
    %v517 = vpop.f32.mrb[0].mxu0
    %518 = vmatprep.mubr.bf16.mxu0 %v255
    %519 = vmatmul.mubr.bf16.gmra.mrb[0].mxu0 %v254
    %v520 = vpop.f32.mrb[0].mxu0
    %v521 = vadd.f32 %v132, %v520
    %v522 = vpop.f32.mrb[0].mxu0
    %v523 = vpop.f32.mrb[0].mxu0
    %v524 = vadd.f32 %v132, %v523
    %v525 = vpop.f32.mrb[0].mxu0
    %526 = vmatprep.mubr.bf16.mxu0 %v257
    %527 = vmatmul.mubr.bf16.gmra.mrb[0].mxu0 %v256
    %v528 = vpop.f32.mrb[0].mxu0
    %v529 = vadd.f32 %v132, %v528
    %v530 = vpop.f32.mrb[0].mxu0
    %v531 = vpop.f32.mrb[0].mxu0
    %v532 = vadd.f32 %v132, %v531
    %v533 = vpop.f32.mrb[0].mxu0
    %534 = vmatprep.mubr.bf16.mxu0 %v259
    %535 = vmatmul.mubr.bf16.gmra.mrb[0].mxu0 %v258
    %v536 = vpop.f32.mrb[0].mxu0
    %v537 = vadd.f32 %v132, %v536
    %v538 = vpop.f32.mrb[0].mxu0
    %v539 = vpop.f32.mrb[0].mxu0
    %v540 = vadd.f32 %v132, %v539
    %v541 = vpop.f32.mrb[0].mxu0
    %542 = vmatprep.mubr.bf16.mxu0 %v261
    %543 = vmatmul.mubr.bf16.gmra.mrb[0].mxu0 %v260
    %v544 = vpop.f32.mrb[0].mxu0
    %v545 = vadd.f32 %v132, %v544
    %v546 = vpop.f32.mrb[0].mxu0
    %v547 = vpop.f32.mrb[0].mxu0
    %v548 = vadd.f32 %v132, %v547
    %v549 = vpop.f32.mrb[0].mxu0
    %550 = vdwg.mxu0
    %v551 = vmax.f32 %v425, 0.0
    %v552 = vmax.f32 %v428, 0.0
    %v553 = vmax.f32 %v433, 0.0
    %v554 = vmax.f32 %v436, 0.0
    %v555 = vmax.f32 %v441, 0.0
    %v556 = vmax.f32 %v444, 0.0
    %v557 = vmax.f32 %v449, 0.0
    %v558 = vmax.f32 %v452, 0.0
    %v559 = vmax.f32 %v457, 0.0
    %v560 = vmax.f32 %v460, 0.0
    %v561 = vmax.f32 %v465, 0.0
    %v562 = vmax.f32 %v468, 0.0
    %v563 = vmax.f32 %v473, 0.0
    %v564 = vmax.f32 %v476, 0.0
    %v565 = vmax.f32 %v481, 0.0
    %v566 = vmax.f32 %v484, 0.0
    %v567 = vmax.f32 %v489, 0.0
    %v568 = vmax.f32 %v492, 0.0
    %v569 = vmax.f32 %v497, 0.0
    %v570 = vmax.f32 %v500, 0.0
    %v571 = vmax.f32 %v505, 0.0
    %v572 = vmax.f32 %v508, 0.0
    %v573 = vmax.f32 %v513, 0.0
    %v574 = vmax.f32 %v516, 0.0
    %v575 = vmax.f32 %v521, 0.0
    %v576 = vmax.f32 %v524, 0.0
    %v577 = vmax.f32 %v529, 0.0
    %v578 = vmax.f32 %v532, 0.0
    %v579 = vmax.f32 %v537, 0.0
    %v580 = vmax.f32 %v540, 0.0
    %v581 = vmax.f32 %v545, 0.0
    %v582 = vmax.f32 %v548, 0.0
    %v583 = vpack.c.bf16 %v552, %v551
    %v584 = vpack.c.bf16 %v554, %v553
    %v585 = vpack.c.bf16 %v556, %v555
    %v586 = vpack.c.bf16 %v558, %v557
    %v587 = vpack.c.bf16 %v560, %v559
    %v588 = vpack.c.bf16 %v562, %v561
    %v589 = vpack.c.bf16 %v564, %v563
    %v590 = vpack.c.bf16 %v566, %v565
    %v591 = vpack.c.bf16 %v568, %v567
    %v592 = vpack.c.bf16 %v570, %v569
    %v593 = vpack.c.bf16 %v572, %v571
    %v594 = vpack.c.bf16 %v574, %v573
    %v595 = vpack.c.bf16 %v576, %v575
    %v596 = vpack.c.bf16 %v578, %v577
    %v597 = vpack.c.bf16 %v580, %v579
    %v598 = vpack.c.bf16 %v582, %v581
    %v599 = vld [vmem:[#allocation7] sm:$0xf]
    %v600 = vld [vmem:[#allocation7 + $0x4] sm:$0xf]
    %v601 = vld [vmem:[#allocation7 + $0x8] sm:$0xf]
    %v602 = vld [vmem:[#allocation7 + $0xc] sm:$0xf]
    %v603 = vld [vmem:[#allocation7 + $0x10] sm:$0xf]
    %v604 = vld [vmem:[#allocation7 + $0x14] sm:$0xf]
    %v605 = vld [vmem:[#allocation7 + $0x18] sm:$0xf]
    %v606 = vld [vmem:[#allocation7 + $0x1c] sm:$0xf]
    %v607 = vld [vmem:[#allocation7 + $0x20] sm:$0xf]
    %v608 = vld [vmem:[#allocation7 + $0x24] sm:$0xf]
    %v609 = vld [vmem:[#allocation7 + $0x28] sm:$0xf]
    %v610 = vld [vmem:[#allocation7 + $0x2c] sm:$0xf]
    %v611 = vld [vmem:[#allocation7 + $0x30] sm:$0xf]
    %v612 = vld [vmem:[#allocation7 + $0x34] sm:$0xf]
    %v613 = vld [vmem:[#allocation7 + $0x38] sm:$0xf]
    %v614 = vld [vmem:[#allocation7 + $0x3c] sm:$0xf]
    %v631 = vunpack.c.l.b16 %v599
    %v632 = vunpack.c.l.b16 %v600
    %v633 = vunpack.c.l.b16 %v601
    %v634 = vunpack.c.l.b16 %v602
    %v635 = vunpack.c.l.b16 %v603
    %v636 = vunpack.c.l.b16 %v604
    %v637 = vunpack.c.l.b16 %v605
    %v638 = vunpack.c.l.b16 %v606
    %v639 = vunpack.c.l.b16 %v607
    %v640 = vunpack.c.l.b16 %v608
    %v641 = vunpack.c.l.b16 %v609
    %v642 = vunpack.c.l.b16 %v610
    %v643 = vunpack.c.l.b16 %v611
    %v644 = vunpack.c.l.b16 %v612
    %v645 = vunpack.c.l.b16 %v613
    %v646 = vunpack.c.l.b16 %v614
    %v647 = vpack.c.b16 %v632, %v631
    %v648 = vpack.c.b16 %v634, %v633
    %v649 = vpack.c.b16 %v636, %v635
    %v650 = vpack.c.b16 %v638, %v637
    %v651 = vpack.c.b16 %v640, %v639
    %v652 = vpack.c.b16 %v642, %v641
    %v653 = vpack.c.b16 %v644, %v643
    %v654 = vpack.c.b16 %v646, %v645
    %663 = vmatprep.subr.bf16.mxu0 0
    %664 = vmatpush1.bf16.msra.mxu0 %v647
    %665 = vmatprep.subr.bf16.mxu0 0
    %666 = vmatpush1.bf16.msra.mxu0 %v648
    %667 = vmatprep.subr.bf16.mxu0 0
    %668 = vmatpush1.bf16.msra.mxu0 %v649
    %669 = vmatprep.subr.bf16.mxu0 0
    %670 = vmatpush1.bf16.msra.mxu0 %v650
    %671 = vmatprep.subr.bf16.mxu0 0
    %672 = vmatpush1.bf16.msra.mxu0 %v651
    %673 = vmatprep.subr.bf16.mxu0 0
    %674 = vmatpush1.bf16.msra.mxu0 %v652
    %675 = vmatprep.subr.bf16.mxu0 0
    %676 = vmatpush1.bf16.msra.mxu0 %v653
    %677 = vmatprep.subr.bf16.mxu0 0
    %678 = vmatpush1.bf16.msra.mxu0 %v654
    %679 = vmatprep.subr.bf16.mxu0 0
    %680 = vmatpush1.bf16.msra.mxu0 0
    %681 = vmatprep.subr.bf16.mxu0 0
    %682 = vmatpush1.bf16.msra.mxu0 0
    %683 = vmatprep.subr.bf16.mxu0 0
    %684 = vmatpush1.bf16.msra.mxu0 0
    %685 = vmatprep.subr.bf16.mxu0 0
    %686 = vmatpush1.bf16.msra.mxu0 0
    %687 = vmatprep.subr.bf16.mxu0 0
    %688 = vmatpush1.bf16.msra.mxu0 0
    %689 = vmatprep.subr.bf16.mxu0 0
    %690 = vmatpush1.bf16.msra.mxu0 0
    %691 = vmatprep.subr.bf16.mxu0 0
    %692 = vmatpush1.bf16.msra.mxu0 0
    %693 = vmatprep.subr.bf16.mxu0 0
    %694 = vmatpush1.bf16.msra.mxu0 0
    %695 = vmatprep.mubr.bf16.mxu0 0
    %696 = vmatmul.mubr.bf16.gmra.mrb[0].mxu0 %v583
    %v697 = vpop.f32.mrb[0].mxu0
    %v698 = vadd.f32 0.0, %v697
    %v699 = vpop.f32.mrb[0].mxu0
    %v700 = vpop.f32.mrb[0].mxu0
    %v701 = vadd.f32 0.0, %v700
    %v702 = vpop.f32.mrb[0].mxu0
    %703 = vmatprep.mubr.bf16.mxu0 0
    %704 = vmatmul.mubr.bf16.gmra.mrb[0].mxu0 %v584
    %v705 = vpop.f32.mrb[0].mxu0
    %v706 = vadd.f32 0.0, %v705
    %v707 = vpop.f32.mrb[0].mxu0
    %v708 = vpop.f32.mrb[0].mxu0
    %v709 = vadd.f32 0.0, %v708
    %v710 = vpop.f32.mrb[0].mxu0
    %711 = vmatprep.mubr.bf16.mxu0 0
    %712 = vmatmul.mubr.bf16.gmra.mrb[0].mxu0 %v585
    %v713 = vpop.f32.mrb[0].mxu0
    %v714 = vadd.f32 0.0, %v713
    %v715 = vpop.f32.mrb[0].mxu0
    %v716 = vpop.f32.mrb[0].mxu0
    %v717 = vadd.f32 0.0, %v716
    %v718 = vpop.f32.mrb[0].mxu0
    %719 = vmatprep.mubr.bf16.mxu0 0
    %720 = vmatmul.mubr.bf16.gmra.mrb[0].mxu0 %v586
    %v721 = vpop.f32.mrb[0].mxu0
    %v722 = vadd.f32 0.0, %v721
    %v723 = vpop.f32.mrb[0].mxu0
    %v724 = vpop.f32.mrb[0].mxu0
    %v725 = vadd.f32 0.0, %v724
    %v726 = vpop.f32.mrb[0].mxu0
    %727 = vmatprep.mubr.bf16.mxu0 0
    %728 = vmatmul.mubr.bf16.gmra.mrb[0].mxu0 %v587
    %v729 = vpop.f32.mrb[0].mxu0
    %v730 = vadd.f32 0.0, %v729
    %v731 = vpop.f32.mrb[0].mxu0
    %v732 = vpop.f32.mrb[0].mxu0
    %v733 = vadd.f32 0.0, %v732
    %v734 = vpop.f32.mrb[0].mxu0
    %735 = vmatprep.mubr.bf16.mxu0 0
    %736 = vmatmul.mubr.bf16.gmra.mrb[0].mxu0 %v588
    %v737 = vpop.f32.mrb[0].mxu0
    %v738 = vadd.f32 0.0, %v737
    %v739 = vpop.f32.mrb[0].mxu0
    %v740 = vpop.f32.mrb[0].mxu0
    %v741 = vadd.f32 0.0, %v740
    %v742 = vpop.f32.mrb[0].mxu0
    %743 = vmatprep.mubr.bf16.mxu0 0
    %744 = vmatmul.mubr.bf16.gmra.mrb[0].mxu0 %v589
    %v745 = vpop.f32.mrb[0].mxu0
    %v746 = vadd.f32 0.0, %v745
    %v747 = vpop.f32.mrb[0].mxu0
    %v748 = vpop.f32.mrb[0].mxu0
    %v749 = vadd.f32 0.0, %v748
    %v750 = vpop.f32.mrb[0].mxu0
    %751 = vmatprep.mubr.bf16.mxu0 0
    %752 = vmatmul.mubr.bf16.gmra.mrb[0].mxu0 %v590
    %v753 = vpop.f32.mrb[0].mxu0
    %v754 = vadd.f32 0.0, %v753
    %v755 = vpop.f32.mrb[0].mxu0
    %v756 = vpop.f32.mrb[0].mxu0
    %v757 = vadd.f32 0.0, %v756
    %v758 = vpop.f32.mrb[0].mxu0
    %759 = vmatprep.mubr.bf16.mxu0 0
    %760 = vmatmul.mubr.bf16.gmra.mrb[0].mxu0 %v591
    %v761 = vpop.f32.mrb[0].mxu0
    %v762 = vadd.f32 0.0, %v761
    %v763 = vpop.f32.mrb[0].mxu0
    %v764 = vpop.f32.mrb[0].mxu0
    %v765 = vadd.f32 0.0, %v764
    %v766 = vpop.f32.mrb[0].mxu0
    %767 = vmatprep.mubr.bf16.mxu0 0
    %768 = vmatmul.mubr.bf16.gmra.mrb[0].mxu0 %v592
    %v769 = vpop.f32.mrb[0].mxu0
    %v770 = vadd.f32 0.0, %v769
    %v771 = vpop.f32.mrb[0].mxu0
    %v772 = vpop.f32.mrb[0].mxu0
    %v773 = vadd.f32 0.0, %v772
    %v774 = vpop.f32.mrb[0].mxu0
    %775 = vmatprep.mubr.bf16.mxu0 0
    %776 = vmatmul.mubr.bf16.gmra.mrb[0].mxu0 %v593
    %v777 = vpop.f32.mrb[0].mxu0
    %v778 = vadd.f32 0.0, %v777
    %v779 = vpop.f32.mrb[0].mxu0
    %v780 = vpop.f32.mrb[0].mxu0
    %v781 = vadd.f32 0.0, %v780
    %v782 = vpop.f32.mrb[0].mxu0
    %783 = vmatprep.mubr.bf16.mxu0 0
    %784 = vmatmul.mubr.bf16.gmra.mrb[0].mxu0 %v594
    %v785 = vpop.f32.mrb[0].mxu0
    %v786 = vadd.f32 0.0, %v785
    %v787 = vpop.f32.mrb[0].mxu0
    %v788 = vpop.f32.mrb[0].mxu0
    %v789 = vadd.f32 0.0, %v788
    %v790 = vpop.f32.mrb[0].mxu0
    %791 = vmatprep.mubr.bf16.mxu0 0
    %792 = vmatmul.mubr.bf16.gmra.mrb[0].mxu0 %v595
    %v793 = vpop.f32.mrb[0].mxu0
    %v794 = vadd.f32 0.0, %v793
    %v795 = vpop.f32.mrb[0].mxu0
    %v796 = vpop.f32.mrb[0].mxu0
    %v797 = vadd.f32 0.0, %v796
    %v798 = vpop.f32.mrb[0].mxu0
    %799 = vmatprep.mubr.bf16.mxu0 0
    %800 = vmatmul.mubr.bf16.gmra.mrb[0].mxu0 %v596
    %v801 = vpop.f32.mrb[0].mxu0
    %v802 = vadd.f32 0.0, %v801
    %v803 = vpop.f32.mrb[0].mxu0
    %v804 = vpop.f32.mrb[0].mxu0
    %v805 = vadd.f32 0.0, %v804
    %v806 = vpop.f32.mrb[0].mxu0
    %807 = vmatprep.mubr.bf16.mxu0 0
    %808 = vmatmul.mubr.bf16.gmra.mrb[0].mxu0 %v597
    %v809 = vpop.f32.mrb[0].mxu0
    %v810 = vadd.f32 0.0, %v809
    %v811 = vpop.f32.mrb[0].mxu0
    %v812 = vpop.f32.mrb[0].mxu0
    %v813 = vadd.f32 0.0, %v812
    %v814 = vpop.f32.mrb[0].mxu0
    %815 = vmatprep.mubr.bf16.mxu0 0
    %816 = vmatmul.mubr.bf16.gmra.mrb[0].mxu0 %v598
    %v817 = vpop.f32.mrb[0].mxu0
    %v818 = vadd.f32 0.0, %v817
    %v819 = vpop.f32.mrb[0].mxu0
    %v820 = vpop.f32.mrb[0].mxu0
    %v821 = vadd.f32 0.0, %v820
    %v822 = vpop.f32.mrb[0].mxu0
    %823 = vdwg.mxu0
    %v824 = vpack.c.bf16 %v701, %v698
    %v825 = vpack.c.bf16 %v709, %v706
    %v826 = vpack.c.bf16 %v717, %v714
    %v827 = vpack.c.bf16 %v725, %v722
    %v828 = vpack.c.bf16 %v733, %v730
    %v829 = vpack.c.bf16 %v741, %v738
    %v830 = vpack.c.bf16 %v749, %v746
    %v831 = vpack.c.bf16 %v757, %v754
    %v832 = vpack.c.bf16 %v765, %v762
    %v833 = vpack.c.bf16 %v773, %v770
    %v834 = vpack.c.bf16 %v781, %v778
    %v835 = vpack.c.bf16 %v789, %v786
    %v836 = vpack.c.bf16 %v797, %v794
    %v837 = vpack.c.bf16 %v805, %v802
    %v838 = vpack.c.bf16 %v813, %v810
    %v839 = vpack.c.bf16 %v821, %v818
    %v840 = vld [vmem:[%s4] sm:$0x1]
    %v842 = vlaneseq
    %v843 = vshrl.u32 %v842, 7
    %v844 = vsub.s32 0, %v843
    %v845 = vrot.slane %v840, %v844
    %847 = vmatprep.subr.bf16.mxu0 0
    %848 = vmatpush1.bf16.msra.mxu0 %v824
    %849 = vmatprep.subr.bf16.mxu0 0
    %850 = vmatpush1.bf16.msra.mxu0 %v825
    %851 = vmatprep.subr.bf16.mxu0 0
    %852 = vmatpush1.bf16.msra.mxu0 %v826
    %853 = vmatprep.subr.bf16.mxu0 0
    %854 = vmatpush1.bf16.msra.mxu0 %v827
    %855 = vmatprep.subr.bf16.mxu0 0
    %856 = vmatpush1.bf16.msra.mxu0 %v828
    %857 = vmatprep.subr.bf16.mxu0 0
    %858 = vmatpush1.bf16.msra.mxu0 %v829
    %859 = vmatprep.subr.bf16.mxu0 0
    %860 = vmatpush1.bf16.msra.mxu0 %v830
    %861 = vmatprep.subr.bf16.mxu0 0
    %862 = vmatpush1.bf16.msra.mxu0 %v831
    %863 = vmatprep.subr.bf16.mxu0 0
    %864 = vmatpush1.bf16.msra.mxu0 %v832
    %865 = vmatprep.subr.bf16.mxu0 0
    %866 = vmatpush1.bf16.msra.mxu0 %v833
    %867 = vmatprep.subr.bf16.mxu0 0
    %868 = vmatpush1.bf16.msra.mxu0 %v834
    %869 = vmatprep.subr.bf16.mxu0 0
    %870 = vmatpush1.bf16.msra.mxu0 %v835
    %871 = vmatprep.subr.bf16.mxu0 0
    %872 = vmatpush1.bf16.msra.mxu0 %v836
    %873 = vmatprep.subr.bf16.mxu0 0
    %874 = vmatpush1.bf16.msra.mxu0 %v837
    %875 = vmatprep.subr.bf16.mxu0 0
    %876 = vmatpush1.bf16.msra.mxu0 %v838
    %877 = vmatprep.subr.bf16.mxu0 0
    %878 = vmatpush1.bf16.msra.mxu0 %v839
    %879 = vmatprep.mubr.bf16.mxu0 %v231
    %880 = vmatmul.mubr.bf16.gmra.mrb[0].mxu0 %v230
    %v881 = vpop.f32.mrb[0].mxu0
    %v882 = vadd.f32 %v845, %v881
    %v883 = vpop.f32.mrb[0].mxu0
    %v884 = vpop.f32.mrb[0].mxu0
    %v885 = vadd.f32 %v845, %v884
    %v886 = vpop.f32.mrb[0].mxu0
    %887 = vmatprep.mubr.bf16.mxu0 %v233
    %888 = vmatmul.mubr.bf16.gmra.mrb[0].mxu0 %v232
    %v889 = vpop.f32.mrb[0].mxu0
    %v890 = vadd.f32 %v845, %v889
    %v891 = vpop.f32.mrb[0].mxu0
    %v892 = vpop.f32.mrb[0].mxu0
    %v893 = vadd.f32 %v845, %v892
    %v894 = vpop.f32.mrb[0].mxu0
    %895 = vmatprep.mubr.bf16.mxu0 %v235
    %896 = vmatmul.mubr.bf16.gmra.mrb[0].mxu0 %v234
    %v897 = vpop.f32.mrb[0].mxu0
    %v898 = vadd.f32 %v845, %v897
    %v899 = vpop.f32.mrb[0].mxu0
    %v900 = vpop.f32.mrb[0].mxu0
    %v901 = vadd.f32 %v845, %v900
    %v902 = vpop.f32.mrb[0].mxu0
    %903 = vmatprep.mubr.bf16.mxu0 %v237
    %904 = vmatmul.mubr.bf16.gmra.mrb[0].mxu0 %v236
    %v905 = vpop.f32.mrb[0].mxu0
    %v906 = vadd.f32 %v845, %v905
    %v907 = vpop.f32.mrb[0].mxu0
    %v908 = vpop.f32.mrb[0].mxu0
    %v909 = vadd.f32 %v845, %v908
    %v910 = vpop.f32.mrb[0].mxu0
    %911 = vmatprep.mubr.bf16.mxu0 %v239
    %912 = vmatmul.mubr.bf16.gmra.mrb[0].mxu0 %v238
    %v913 = vpop.f32.mrb[0].mxu0
    %v914 = vadd.f32 %v845, %v913
    %v915 = vpop.f32.mrb[0].mxu0
    %v916 = vpop.f32.mrb[0].mxu0
    %v917 = vadd.f32 %v845, %v916
    %v918 = vpop.f32.mrb[0].mxu0
    %919 = vmatprep.mubr.bf16.mxu0 %v241
    %920 = vmatmul.mubr.bf16.gmra.mrb[0].mxu0 %v240
    %v921 = vpop.f32.mrb[0].mxu0
    %v922 = vadd.f32 %v845, %v921
    %v923 = vpop.f32.mrb[0].mxu0
    %v924 = vpop.f32.mrb[0].mxu0
    %v925 = vadd.f32 %v845, %v924
    %v926 = vpop.f32.mrb[0].mxu0
    %927 = vmatprep.mubr.bf16.mxu0 %v243
    %928 = vmatmul.mubr.bf16.gmra.mrb[0].mxu0 %v242
    %v929 = vpop.f32.mrb[0].mxu0
    %v930 = vadd.f32 %v845, %v929
    %v931 = vpop.f32.mrb[0].mxu0
    %v932 = vpop.f32.mrb[0].mxu0
    %v933 = vadd.f32 %v845, %v932
    %v934 = vpop.f32.mrb[0].mxu0
    %935 = vmatprep.mubr.bf16.mxu0 %v245
    %936 = vmatmul.mubr.bf16.gmra.mrb[0].mxu0 %v244
    %v937 = vpop.f32.mrb[0].mxu0
    %v938 = vadd.f32 %v845, %v937
    %v939 = vpop.f32.mrb[0].mxu0
    %v940 = vpop.f32.mrb[0].mxu0
    %v941 = vadd.f32 %v845, %v940
    %v942 = vpop.f32.mrb[0].mxu0
    %943 = vmatprep.mubr.bf16.mxu0 %v247
    %944 = vmatmul.mubr.bf16.gmra.mrb[0].mxu0 %v246
    %v945 = vpop.f32.mrb[0].mxu0
    %v946 = vadd.f32 %v845, %v945
    %v947 = vpop.f32.mrb[0].mxu0
    %v948 = vpop.f32.mrb[0].mxu0
    %v949 = vadd.f32 %v845, %v948
    %v950 = vpop.f32.mrb[0].mxu0
    %951 = vmatprep.mubr.bf16.mxu0 %v249
    %952 = vmatmul.mubr.bf16.gmra.mrb[0].mxu0 %v248
    %v953 = vpop.f32.mrb[0].mxu0
    %v954 = vadd.f32 %v845, %v953
    %v955 = vpop.f32.mrb[0].mxu0
    %v956 = vpop.f32.mrb[0].mxu0
    %v957 = vadd.f32 %v845, %v956
    %v958 = vpop.f32.mrb[0].mxu0
    %959 = vmatprep.mubr.bf16.mxu0 %v251
    %960 = vmatmul.mubr.bf16.gmra.mrb[0].mxu0 %v250
    %v961 = vpop.f32.mrb[0].mxu0
    %v962 = vadd.f32 %v845, %v961
    %v963 = vpop.f32.mrb[0].mxu0
    %v964 = vpop.f32.mrb[0].mxu0
    %v965 = vadd.f32 %v845, %v964
    %v966 = vpop.f32.mrb[0].mxu0
    %967 = vmatprep.mubr.bf16.mxu0 %v253
    %968 = vmatmul.mubr.bf16.gmra.mrb[0].mxu0 %v252
    %v969 = vpop.f32.mrb[0].mxu0
    %v970 = vadd.f32 %v845, %v969
    %v971 = vpop.f32.mrb[0].mxu0
    %v972 = vpop.f32.mrb[0].mxu0
    %v973 = vadd.f32 %v845, %v972
    %v974 = vpop.f32.mrb[0].mxu0
    %975 = vmatprep.mubr.bf16.mxu0 %v255
    %976 = vmatmul.mubr.bf16.gmra.mrb[0].mxu0 %v254
    %v977 = vpop.f32.mrb[0].mxu0
    %v978 = vadd.f32 %v845, %v977
    %v979 = vpop.f32.mrb[0].mxu0
    %v980 = vpop.f32.mrb[0].mxu0
    %v981 = vadd.f32 %v845, %v980
    %v982 = vpop.f32.mrb[0].mxu0
    %983 = vmatprep.mubr.bf16.mxu0 %v257
    %984 = vmatmul.mubr.bf16.gmra.mrb[0].mxu0 %v256
    %v985 = vpop.f32.mrb[0].mxu0
    %v986 = vadd.f32 %v845, %v985
    %v987 = vpop.f32.mrb[0].mxu0
    %v988 = vpop.f32.mrb[0].mxu0
    %v989 = vadd.f32 %v845, %v988
    %v990 = vpop.f32.mrb[0].mxu0
    %991 = vmatprep.mubr.bf16.mxu0 %v259
    %992 = vmatmul.mubr.bf16.gmra.mrb[0].mxu0 %v258
    %v993 = vpop.f32.mrb[0].mxu0
    %v994 = vadd.f32 %v845, %v993
    %v995 = vpop.f32.mrb[0].mxu0
    %v996 = vpop.f32.mrb[0].mxu0
    %v997 = vadd.f32 %v845, %v996
    %v998 = vpop.f32.mrb[0].mxu0
    %999 = vmatprep.mubr.bf16.mxu0 %v261
    %1000 = vmatmul.mubr.bf16.gmra.mrb[0].mxu0 %v260
    %v1001 = vpop.f32.mrb[0].mxu0
    %v1002 = vadd.f32 %v845, %v1001
    %v1003 = vpop.f32.mrb[0].mxu0
    %v1004 = vpop.f32.mrb[0].mxu0
    %v1005 = vadd.f32 %v845, %v1004
    %v1006 = vpop.f32.mrb[0].mxu0
    %1007 = vdwg.mxu0
    %1008 = vmax.xlane.f32.xlu0 %v882
    %v1009 = vpop.xlane.xlu0 %1008
    %1010 = vmax.xlane.f32.xlu0 %v885
    %v1011 = vpop.xlane.xlu0 %1010
    %1012 = vmax.xlane.f32.xlu0 %v890
    %v1013 = vpop.xlane.xlu0 %1012
    %1014 = vmax.xlane.f32.xlu0 %v893
    %v1015 = vpop.xlane.xlu0 %1014
    %1016 = vmax.xlane.f32.xlu0 %v898
    %v1017 = vpop.xlane.xlu0 %1016
    %1018 = vmax.xlane.f32.xlu0 %v901
    %v1019 = vpop.xlane.xlu0 %1018
    %1020 = vmax.xlane.f32.xlu0 %v906
    %v1021 = vpop.xlane.xlu0 %1020
    %1022 = vmax.xlane.f32.xlu0 %v909
    %v1023 = vpop.xlane.xlu0 %1022
    %1024 = vmax.xlane.f32.xlu0 %v914
    %v1025 = vpop.xlane.xlu0 %1024
    %1026 = vmax.xlane.f32.xlu0 %v917
    %v1027 = vpop.xlane.xlu0 %1026
    %1028 = vmax.xlane.f32.xlu0 %v922
    %v1029 = vpop.xlane.xlu0 %1028
    %1030 = vmax.xlane.f32.xlu0 %v925
    %v1031 = vpop.xlane.xlu0 %1030
    %1032 = vmax.xlane.f32.xlu0 %v930
    %v1033 = vpop.xlane.xlu0 %1032
    %1034 = vmax.xlane.f32.xlu0 %v933
    %v1035 = vpop.xlane.xlu0 %1034
    %1036 = vmax.xlane.f32.xlu0 %v938
    %v1037 = vpop.xlane.xlu0 %1036
    %1038 = vmax.xlane.f32.xlu0 %v941
    %v1039 = vpop.xlane.xlu0 %1038
    %1040 = vmax.xlane.f32.xlu0 %v946
    %v1041 = vpop.xlane.xlu0 %1040
    %1042 = vmax.xlane.f32.xlu0 %v949
    %v1043 = vpop.xlane.xlu0 %1042
    %1044 = vmax.xlane.f32.xlu0 %v954
    %v1045 = vpop.xlane.xlu0 %1044
    %1046 = vmax.xlane.f32.xlu0 %v957
    %v1047 = vpop.xlane.xlu0 %1046
    %1048 = vmax.xlane.f32.xlu0 %v962
    %v1049 = vpop.xlane.xlu0 %1048
    %1050 = vmax.xlane.f32.xlu0 %v965
    %v1051 = vpop.xlane.xlu0 %1050
    %1052 = vmax.xlane.f32.xlu0 %v970
    %v1053 = vpop.xlane.xlu0 %1052
    %1054 = vmax.xlane.f32.xlu0 %v973
    %v1055 = vpop.xlane.xlu0 %1054
    %1056 = vmax.xlane.f32.xlu0 %v978
    %v1057 = vpop.xlane.xlu0 %1056
    %1058 = vmax.xlane.f32.xlu0 %v981
    %v1059 = vpop.xlane.xlu0 %1058
    %1060 = vmax.xlane.f32.xlu0 %v986
    %v1061 = vpop.xlane.xlu0 %1060
    %1062 = vmax.xlane.f32.xlu0 %v989
    %v1063 = vpop.xlane.xlu0 %1062
    %1064 = vmax.xlane.f32.xlu0 %v994
    %v1065 = vpop.xlane.xlu0 %1064
    %1066 = vmax.xlane.f32.xlu0 %v997
    %v1067 = vpop.xlane.xlu0 %1066
    %1068 = vmax.xlane.f32.xlu0 %v1002
    %v1069 = vpop.xlane.xlu0 %1068
    %1070 = vmax.xlane.f32.xlu0 %v1005
    %v1071 = vpop.xlane.xlu0 %1070
    %v1072 = vsub.f32 %v882, %v1009
    %v1073 = vsub.f32 %v885, %v1011
    %v1074 = vsub.f32 %v890, %v1013
    %v1075 = vsub.f32 %v893, %v1015
    %v1076 = vsub.f32 %v898, %v1017
    %v1077 = vsub.f32 %v901, %v1019
    %v1078 = vsub.f32 %v906, %v1021
    %v1079 = vsub.f32 %v909, %v1023
    %v1080 = vsub.f32 %v914, %v1025
    %v1081 = vsub.f32 %v917, %v1027
    %v1082 = vsub.f32 %v922, %v1029
    %v1083 = vsub.f32 %v925, %v1031
    %v1084 = vsub.f32 %v930, %v1033
    %v1085 = vsub.f32 %v933, %v1035
    %v1086 = vsub.f32 %v938, %v1037
    %v1087 = vsub.f32 %v941, %v1039
    %v1088 = vsub.f32 %v946, %v1041
    %v1089 = vsub.f32 %v949, %v1043
    %v1090 = vsub.f32 %v954, %v1045
    %v1091 = vsub.f32 %v957, %v1047
    %v1092 = vsub.f32 %v962, %v1049
    %v1093 = vsub.f32 %v965, %v1051
    %v1094 = vsub.f32 %v970, %v1053
    %v1095 = vsub.f32 %v973, %v1055
    %v1096 = vsub.f32 %v978, %v1057
    %v1097 = vsub.f32 %v981, %v1059
    %v1098 = vsub.f32 %v986, %v1061
    %v1099 = vsub.f32 %v989, %v1063
    %v1100 = vsub.f32 %v994, %v1065
    %v1101 = vsub.f32 %v997, %v1067
    %v1102 = vsub.f32 %v1002, %v1069
    %v1103 = vsub.f32 %v1005, %v1071
    %v1104 = vmul.f32 %v1072, 1.442695
    %v1105 = vpow.pop %v1104
    %v1106 = vmul.f32 %v1073, 1.442695
    %v1107 = vpow.pop %v1106
    %v1108 = vmul.f32 %v1074, 1.442695
    %v1109 = vpow.pop %v1108
    %v1110 = vmul.f32 %v1075, 1.442695
    %v1111 = vpow.pop %v1110
    %v1112 = vmul.f32 %v1076, 1.442695
    %v1113 = vpow.pop %v1112
    %v1114 = vmul.f32 %v1077, 1.442695
    %v1115 = vpow.pop %v1114
    %v1116 = vmul.f32 %v1078, 1.442695
    %v1117 = vpow.pop %v1116
    %v1118 = vmul.f32 %v1079, 1.442695
    %v1119 = vpow.pop %v1118
    %v1120 = vmul.f32 %v1080, 1.442695
    %v1121 = vpow.pop %v1120
    %v1122 = vmul.f32 %v1081, 1.442695
    %v1123 = vpow.pop %v1122
    %v1124 = vmul.f32 %v1082, 1.442695
    %v1125 = vpow.pop %v1124
    %v1126 = vmul.f32 %v1083, 1.442695
    %v1127 = vpow.pop %v1126
    %v1128 = vmul.f32 %v1084, 1.442695
    %v1129 = vpow.pop %v1128
    %v1130 = vmul.f32 %v1085, 1.442695
    %v1131 = vpow.pop %v1130
    %v1132 = vmul.f32 %v1086, 1.442695
    %v1133 = vpow.pop %v1132
    %v1134 = vmul.f32 %v1087, 1.442695
    %v1135 = vpow.pop %v1134
    %v1136 = vmul.f32 %v1088, 1.442695
    %v1137 = vpow.pop %v1136
    %v1138 = vmul.f32 %v1089, 1.442695
    %v1139 = vpow.pop %v1138
    %v1140 = vmul.f32 %v1090, 1.442695
    %v1141 = vpow.pop %v1140
    %v1142 = vmul.f32 %v1091, 1.442695
    %v1143 = vpow.pop %v1142
    %v1144 = vmul.f32 %v1092, 1.442695
    %v1145 = vpow.pop %v1144
    %v1146 = vmul.f32 %v1093, 1.442695
    %v1147 = vpow.pop %v1146
    %v1148 = vmul.f32 %v1094, 1.442695
    %v1149 = vpow.pop %v1148
    %v1150 = vmul.f32 %v1095, 1.442695
    %v1151 = vpow.pop %v1150
    %v1152 = vmul.f32 %v1096, 1.442695
    %v1153 = vpow.pop %v1152
    %v1154 = vmul.f32 %v1097, 1.442695
    %v1155 = vpow.pop %v1154
    %v1156 = vmul.f32 %v1098, 1.442695
    %v1157 = vpow.pop %v1156
    %v1158 = vmul.f32 %v1099, 1.442695
    %v1159 = vpow.pop %v1158
    %v1160 = vmul.f32 %v1100, 1.442695
    %v1161 = vpow.pop %v1160
    %v1162 = vmul.f32 %v1101, 1.442695
    %v1163 = vpow.pop %v1162
    %v1164 = vmul.f32 %v1102, 1.442695
    %v1165 = vpow.pop %v1164
    %v1166 = vmul.f32 %v1103, 1.442695
    %v1167 = vpow.pop %v1166
    %1168 = vadd.xlane.f32.xlu0 %v1105
    %v1169 = vpop.xlane.xlu0 %1168
    %1170 = vadd.xlane.f32.xlu0 %v1107
    %v1171 = vpop.xlane.xlu0 %1170
    %1172 = vadd.xlane.f32.xlu0 %v1109
    %v1173 = vpop.xlane.xlu0 %1172
    %1174 = vadd.xlane.f32.xlu0 %v1111
    %v1175 = vpop.xlane.xlu0 %1174
    %1176 = vadd.xlane.f32.xlu0 %v1113
    %v1177 = vpop.xlane.xlu0 %1176
    %1178 = vadd.xlane.f32.xlu0 %v1115
    %v1179 = vpop.xlane.xlu0 %1178
    %1180 = vadd.xlane.f32.xlu0 %v1117
    %v1181 = vpop.xlane.xlu0 %1180
    %1182 = vadd.xlane.f32.xlu0 %v1119
    %v1183 = vpop.xlane.xlu0 %1182
    %1184 = vadd.xlane.f32.xlu0 %v1121
    %v1185 = vpop.xlane.xlu0 %1184
    %1186 = vadd.xlane.f32.xlu0 %v1123
    %v1187 = vpop.xlane.xlu0 %1186
    %1188 = vadd.xlane.f32.xlu0 %v1125
    %v1189 = vpop.xlane.xlu0 %1188
    %1190 = vadd.xlane.f32.xlu0 %v1127
    %v1191 = vpop.xlane.xlu0 %1190
    %1192 = vadd.xlane.f32.xlu0 %v1129
    %v1193 = vpop.xlane.xlu0 %1192
    %1194 = vadd.xlane.f32.xlu0 %v1131
    %v1195 = vpop.xlane.xlu0 %1194
    %1196 = vadd.xlane.f32.xlu0 %v1133
    %v1197 = vpop.xlane.xlu0 %1196
    %1198 = vadd.xlane.f32.xlu0 %v1135
    %v1199 = vpop.xlane.xlu0 %1198
    %1200 = vadd.xlane.f32.xlu0 %v1137
    %v1201 = vpop.xlane.xlu0 %1200
    %1202 = vadd.xlane.f32.xlu0 %v1139
    %v1203 = vpop.xlane.xlu0 %1202
    %1204 = vadd.xlane.f32.xlu0 %v1141
    %v1205 = vpop.xlane.xlu0 %1204
    %1206 = vadd.xlane.f32.xlu0 %v1143
    %v1207 = vpop.xlane.xlu0 %1206
    %1208 = vadd.xlane.f32.xlu0 %v1145
    %v1209 = vpop.xlane.xlu0 %1208
    %1210 = vadd.xlane.f32.xlu0 %v1147
    %v1211 = vpop.xlane.xlu0 %1210
    %1212 = vadd.xlane.f32.xlu0 %v1149
    %v1213 = vpop.xlane.xlu0 %1212
    %1214 = vadd.xlane.f32.xlu0 %v1151
    %v1215 = vpop.xlane.xlu0 %1214
    %1216 = vadd.xlane.f32.xlu0 %v1153
    %v1217 = vpop.xlane.xlu0 %1216
    %1218 = vadd.xlane.f32.xlu0 %v1155
    %v1219 = vpop.xlane.xlu0 %1218
    %1220 = vadd.xlane.f32.xlu0 %v1157
    %v1221 = vpop.xlane.xlu0 %1220
    %1222 = vadd.xlane.f32.xlu0 %v1159
    %v1223 = vpop.xlane.xlu0 %1222
    %1224 = vadd.xlane.f32.xlu0 %v1161
    %v1225 = vpop.xlane.xlu0 %1224
    %1226 = vadd.xlane.f32.xlu0 %v1163
    %v1227 = vpop.xlane.xlu0 %1226
    %1228 = vadd.xlane.f32.xlu0 %v1165
    %v1229 = vpop.xlane.xlu0 %1228
    %1230 = vadd.xlane.f32.xlu0 %v1167
    %v1231 = vpop.xlane.xlu0 %1230
    %v1232 = vlog2.pop %v1169
    %v1233 = vmul.f32 %v1232, 0.6931472
    %v1234 = vlog2.pop %v1171
    %v1235 = vmul.f32 %v1234, 0.6931472
    %v1236 = vlog2.pop %v1173
    %v1237 = vmul.f32 %v1236, 0.6931472
    %v1238 = vlog2.pop %v1175
    %v1239 = vmul.f32 %v1238, 0.6931472
    %v1240 = vlog2.pop %v1177
    %v1241 = vmul.f32 %v1240, 0.6931472
    %v1242 = vlog2.pop %v1179
    %v1243 = vmul.f32 %v1242, 0.6931472
    %v1244 = vlog2.pop %v1181
    %v1245 = vmul.f32 %v1244, 0.6931472
    %v1246 = vlog2.pop %v1183
    %v1247 = vmul.f32 %v1246, 0.6931472
    %v1248 = vlog2.pop %v1185
    %v1249 = vmul.f32 %v1248, 0.6931472
    %v1250 = vlog2.pop %v1187
    %v1251 = vmul.f32 %v1250, 0.6931472
    %v1252 = vlog2.pop %v1189
    %v1253 = vmul.f32 %v1252, 0.6931472
    %v1254 = vlog2.pop %v1191
    %v1255 = vmul.f32 %v1254, 0.6931472
    %v1256 = vlog2.pop %v1193
    %v1257 = vmul.f32 %v1256, 0.6931472
    %v1258 = vlog2.pop %v1195
    %v1259 = vmul.f32 %v1258, 0.6931472
    %v1260 = vlog2.pop %v1197
    %v1261 = vmul.f32 %v1260, 0.6931472
    %v1262 = vlog2.pop %v1199
    %v1263 = vmul.f32 %v1262, 0.6931472
    %v1264 = vlog2.pop %v1201
    %v1265 = vmul.f32 %v1264, 0.6931472
    %v1266 = vlog2.pop %v1203
    %v1267 = vmul.f32 %v1266, 0.6931472
    %v1268 = vlog2.pop %v1205
    %v1269 = vmul.f32 %v1268, 0.6931472
    %v1270 = vlog2.pop %v1207
    %v1271 = vmul.f32 %v1270, 0.6931472
    %v1272 = vlog2.pop %v1209
    %v1273 = vmul.f32 %v1272, 0.6931472
    %v1274 = vlog2.pop %v1211
    %v1275 = vmul.f32 %v1274, 0.6931472
    %v1276 = vlog2.pop %v1213
    %v1277 = vmul.f32 %v1276, 0.6931472
    %v1278 = vlog2.pop %v1215
    %v1279 = vmul.f32 %v1278, 0.6931472
    %v1280 = vlog2.pop %v1217
    %v1281 = vmul.f32 %v1280, 0.6931472
    %v1282 = vlog2.pop %v1219
    %v1283 = vmul.f32 %v1282, 0.6931472
    %v1284 = vlog2.pop %v1221
    %v1285 = vmul.f32 %v1284, 0.6931472
    %v1286 = vlog2.pop %v1223
    %v1287 = vmul.f32 %v1286, 0.6931472
    %v1288 = vlog2.pop %v1225
    %v1289 = vmul.f32 %v1288, 0.6931472
    %v1290 = vlog2.pop %v1227
    %v1291 = vmul.f32 %v1290, 0.6931472
    %v1292 = vlog2.pop %v1229
    %v1293 = vmul.f32 %v1292, 0.6931472
    %v1294 = vlog2.pop %v1231
    %v1295 = vmul.f32 %v1294, 0.6931472
    %v1296 = vadd.f32 %v1233, %v1009
    %v1297 = vadd.f32 %v1235, %v1011
    %v1298 = vadd.f32 %v1237, %v1013
    %v1299 = vadd.f32 %v1239, %v1015
    %v1300 = vadd.f32 %v1241, %v1017
    %v1301 = vadd.f32 %v1243, %v1019
    %v1302 = vadd.f32 %v1245, %v1021
    %v1303 = vadd.f32 %v1247, %v1023
    %v1304 = vadd.f32 %v1249, %v1025
    %v1305 = vadd.f32 %v1251, %v1027
    %v1306 = vadd.f32 %v1253, %v1029
    %v1307 = vadd.f32 %v1255, %v1031
    %v1308 = vadd.f32 %v1257, %v1033
    %v1309 = vadd.f32 %v1259, %v1035
    %v1310 = vadd.f32 %v1261, %v1037
    %v1311 = vadd.f32 %v1263, %v1039
    %v1312 = vadd.f32 %v1265, %v1041
    %v1313 = vadd.f32 %v1267, %v1043
    %v1314 = vadd.f32 %v1269, %v1045
    %v1315 = vadd.f32 %v1271, %v1047
    %v1316 = vadd.f32 %v1273, %v1049
    %v1317 = vadd.f32 %v1275, %v1051
    %v1318 = vadd.f32 %v1277, %v1053
    %v1319 = vadd.f32 %v1279, %v1055
    %v1320 = vadd.f32 %v1281, %v1057
    %v1321 = vadd.f32 %v1283, %v1059
    %v1322 = vadd.f32 %v1285, %v1061
    %v1323 = vadd.f32 %v1287, %v1063
    %v1324 = vadd.f32 %v1289, %v1065
    %v1325 = vadd.f32 %v1291, %v1067
    %v1326 = vadd.f32 %v1293, %v1069
    %v1327 = vadd.f32 %v1295, %v1071
    %v1328 = vsub.f32 %v882, %v1296
    %v1329 = vsub.f32 %v885, %v1297
    %v1330 = vsub.f32 %v890, %v1298
    %v1331 = vsub.f32 %v893, %v1299
    %v1332 = vsub.f32 %v898, %v1300
    %v1333 = vsub.f32 %v901, %v1301
    %v1334 = vsub.f32 %v906, %v1302
    %v1335 = vsub.f32 %v909, %v1303
    %v1336 = vsub.f32 %v914, %v1304
    %v1337 = vsub.f32 %v917, %v1305
    %v1338 = vsub.f32 %v922, %v1306
    %v1339 = vsub.f32 %v925, %v1307
    %v1340 = vsub.f32 %v930, %v1308
    %v1341 = vsub.f32 %v933, %v1309
    %v1342 = vsub.f32 %v938, %v1310
    %v1343 = vsub.f32 %v941, %v1311
    %v1344 = vsub.f32 %v946, %v1312
    %v1345 = vsub.f32 %v949, %v1313
    %v1346 = vsub.f32 %v954, %v1314
    %v1347 = vsub.f32 %v957, %v1315
    %v1348 = vsub.f32 %v962, %v1316
    %v1349 = vsub.f32 %v965, %v1317
    %v1350 = vsub.f32 %v970, %v1318
    %v1351 = vsub.f32 %v973, %v1319
    %v1352 = vsub.f32 %v978, %v1320
    %v1353 = vsub.f32 %v981, %v1321
    %v1354 = vsub.f32 %v986, %v1322
    %v1355 = vsub.f32 %v989, %v1323
    %v1356 = vsub.f32 %v994, %v1324
    %v1357 = vsub.f32 %v997, %v1325
    %v1358 = vsub.f32 %v1002, %v1326
    %v1359 = vsub.f32 %v1005, %v1327
    %1360 = vst [vmem:[#allocation8] sm:$0xff] %v1328
    %1361 = vst [vmem:[#allocation8 + $0x8] sm:$0xff] %v1329
    %1362 = vst [vmem:[#allocation8 + $0x10] sm:$0xff] %v1330
    %1363 = vst [vmem:[#allocation8 + $0x18] sm:$0xff] %v1331
    %1364 = vst [vmem:[#allocation8 + $0x20] sm:$0xff] %v1332
    %1365 = vst [vmem:[#allocation8 + $0x28] sm:$0xff] %v1333
    %1366 = vst [vmem:[#allocation8 + $0x30] sm:$0xff] %v1334
    %1367 = vst [vmem:[#allocation8 + $0x38] sm:$0xff] %v1335
    %1368 = vst [vmem:[#allocation8 + $0x40] sm:$0xff] %v1336
    %1369 = vst [vmem:[#allocation8 + $0x48] sm:$0xff] %v1337
    %1370 = vst [vmem:[#allocation8 + $0x50] sm:$0xff] %v1338
    %1371 = vst [vmem:[#allocation8 + $0x58] sm:$0xff] %v1339
    %1372 = vst [vmem:[#allocation8 + $0x60] sm:$0xff] %v1340
    %1373 = vst [vmem:[#allocation8 + $0x68] sm:$0xff] %v1341
    %1374 = vst [vmem:[#allocation8 + $0x70] sm:$0xff] %v1342
    %1375 = vst [vmem:[#allocation8 + $0x78] sm:$0xff] %v1343
    %1376 = vst [vmem:[#allocation8 + $0x80] sm:$0xff] %v1344
    %1377 = vst [vmem:[#allocation8 + $0x88] sm:$0xff] %v1345
    %1378 = vst [vmem:[#allocation8 + $0x90] sm:$0xff] %v1346
    %1379 = vst [vmem:[#allocation8 + $0x98] sm:$0xff] %v1347
    %1380 = vst [vmem:[#allocation8 + $0xa0] sm:$0xff] %v1348
    %1381 = vst [vmem:[#allocation8 + $0xa8] sm:$0xff] %v1349
    %1382 = vst [vmem:[#allocation8 + $0xb0] sm:$0xff] %v1350
    %1383 = vst [vmem:[#allocation8 + $0xb8] sm:$0xff] %v1351
    %1384 = vst [vmem:[#allocation8 + $0xc0] sm:$0xff] %v1352
    %1385 = vst [vmem:[#allocation8 + $0xc8] sm:$0xff] %v1353
    %1386 = vst [vmem:[#allocation8 + $0xd0] sm:$0xff] %v1354
    %1387 = vst [vmem:[#allocation8 + $0xd8] sm:$0xff] %v1355
    %1388 = vst [vmem:[#allocation8 + $0xe0] sm:$0xff] %v1356
    %1389 = vst [vmem:[#allocation8 + $0xe8] sm:$0xff] %v1357
    %1390 = vst [vmem:[#allocation8 + $0xf0] sm:$0xff] %v1358
    %1391 = vst [vmem:[#allocation8 + $0xf8] sm:$0xff] %v1359
    // Predicated region
    $region34: #{tpu_custom_call.1} parent=1 // pred_check
      _
    $region35: #{tpu_custom_call.1} parent=1 // pred_check_branch
      %1393 = sbr.rel (0) target = $region37
    $region36: #{tpu_custom_call.1} parent=1 // pred_region
      %s1395 = ssub.s32 4096, 4096
      %1396 = vsyncadd [#allocation4], %s1395
      %s1397 = sshll.u32 [#allocation8], 4
      %s1398 = int_to_ptr.vmem [resolvable:$true] %s1397
      %1403 = dma.vmem_to_hbm [thread:$0]  %s1398, 4096, %s5, [#allocation4], 128, 128, 8
    $region37: #{tpu_custom_call.1} parent=1 // pred_fallthru
      _
    // Predicated region
    $region38: #{tpu_custom_call.1} parent=1 // pred_check
      _
    $region39: #{tpu_custom_call.1} parent=1 // pred_check_branch
      %1405 = sbr.rel (0) target = $region41
    $region40: #{tpu_custom_call.1} parent=1 // pred_region
      %1406 = dma.done [#allocation4], 4096
    $region41: #{tpu_custom_call.1} parent=1 // pred_fallthru
      _
    %1407 = vsyncpa [#allocation3], 1
    %1408 = vsyncpa [#allocation6], 1
    %1409 = vsyncpa [#allocation4], 1

</llo_original>
